<compile_context>
chip_gen: v7x
topology: tpu7x:2x2x1
jax: 0.10.0
libtpu: 0.0.40
codegen_flags: <defaults>
</compile_context>

<pallas_src>
import functools

import jax
import jax.numpy as jnp
from jax.experimental import pallas as pl
from jax.experimental.pallas import tpu as pltpu


# --------------------------- shared in-kernel math ---------------------------
def _row_pnorm(x, p_norm):
  if p_norm == 1:
    return jnp.sum(jnp.abs(x), axis=1, keepdims=True)
  return jnp.sqrt(jnp.sum(x * x, axis=1, keepdims=True))


def _onehot_gather(idx_col, table):
  """Gather rows of a VMEM-resident table via a one-hot MXU matmul."""
  tb = idx_col.shape[0]
  n = table.shape[0]
  iota = jax.lax.broadcasted_iota(jnp.int32, (tb, n), 1)
  onehot = (iota == idx_col).astype(jnp.float32)
  return jnp.dot(onehot, table, preferred_element_type=jnp.float32)


def _tile_loss_contrib(ph, pr, pt, pw, nh, nr, nt, nw, mask,
                       *, margin, alpha, p_norm, batch, dim):
  """Masked per-tile contribution to the TransH loss (running-sum form)."""
  def side(h, r, t, w):
    # fused hyperplane projections:
    #   (h - (h.w)w) + r - (t - (t.w)w) = (h + r - t) - ((h.w) - (t.w)) * w
    hw = jnp.sum(h * w, axis=1, keepdims=True)
    tw = jnp.sum(t * w, axis=1, keepdims=True)
    scores = (h + r - t) - (hw - tw) * w
    dist = _row_pnorm(scores, p_norm)                          # (tile_b, 1)
    reg_rows = _row_pnorm(h, p_norm) + _row_pnorm(t, p_norm)   # (tile_b, 1)
    r2_rows = jnp.sum(r * r, axis=1, keepdims=True)            # (tile_b, 1)
    return dist, reg_rows, r2_rows

  pd, p_reg, p_r2 = side(ph, pr, pt, pw)
  nd, n_reg, n_r2 = side(nh, nr, nt, nw)

  # MarginRankingLoss with target = -1: mean(max(0, (pos - neg) + margin))
  hinge = jnp.maximum(pd - nd + margin, 0.0)
  inv_b = 1.0 / batch
  return (jnp.sum(hinge * mask) * inv_b
          + (alpha / 3.0) * (jnp.sum((p_reg + n_reg) * mask) * inv_b
                             + jnp.sum((p_r2 + n_r2) * mask) * (inv_b / dim)))


# ----------------------- kernel 1: fully VMEM-resident -----------------------
def _transh_resident_kernel(
    phc, ptc, nhc, ntc, prc, nrc,     # (tile_b, 1) int32 index columns (VMEM)
    ent_ref,                          # (Epad, D)   f32, VMEM-resident
    relnorm_ref,                      # (Rpad, 2D)  f32, VMEM-resident
    out_ref,                          # (1, 1)      f32
    acc_ref,                          # VMEM (1, 1) scratch: running loss sum
    *, margin, alpha, p_norm, batch):
  i = pl.program_id(0)
  n_tiles = pl.num_programs(0)
  tile_b = phc.shape[0]
  dim = ent_ref.shape[1]

  @pl.when(i == 0)
  def _():
    acc_ref[...] = jnp.zeros_like(acc_ref)

  ent = ent_ref[...]
  relnorm = relnorm_ref[...]

  ph = _onehot_gather(phc[...], ent)
  pt = _onehot_gather(ptc[...], ent)
  nh = _onehot_gather(nhc[...], ent)
  nt = _onehot_gather(ntc[...], ent)
  prw = _onehot_gather(prc[...], relnorm)        # (tile_b, 2D): [rel | norm]
  nrw = _onehot_gather(nrc[...], relnorm)
  pr, pw = prw[:, :dim], prw[:, dim:]
  nr, nw = nrw[:, :dim], nrw[:, dim:]

  rows = i * tile_b + jax.lax.broadcasted_iota(jnp.int32, (tile_b, 1), 0)
  mask = (rows < batch).astype(jnp.float32)

  contrib = _tile_loss_contrib(ph, pr, pt, pw, nh, nr, nt, nw, mask,
                               margin=margin, alpha=alpha, p_norm=p_norm,
                               batch=batch, dim=dim)
  acc_ref[...] += jnp.reshape(contrib, (1, 1))

  @pl.when(i == n_tiles - 1)
  def _():
    # constant from mean(||h|| - 1) + mean(||t|| - 1) on both sides: -4*alpha/3
    out_ref[...] = (acc_ref[...] - (4.0 * alpha / 3.0)).astype(out_ref.dtype)


# ------------------ kernel 2: streaming entity gather (HBM) ------------------
def _transh_streaming_kernel(
    # scalar-prefetch refs (SMEM, 1-D int32): entity row indices for DMA
    ph_idx, pt_idx, nh_idx, nt_idx,
    # inputs
    prc, nrc,                         # (tile_b, 1) int32 relation index tiles
    ent_hbm,                          # (E, D) f32, memory_space=pl.ANY (HBM)
    relnorm_ref,                      # (Rpad, 2D) f32, VMEM-resident
    # output
    out_ref,                          # (1, 1) f32
    # scratch
    ebuf,                             # VMEM (2, 4, tile_b, D): double-buffered
    sems,                             # DMA semaphores (2,): one per slot
    acc_ref,                          # VMEM (1, 1): running loss sum
    *, margin, alpha, p_norm, batch):
  i = pl.program_id(0)
  n_tiles = pl.num_programs(0)
  tile_b = ebuf.shape[2]
  dim = ebuf.shape[3]
  ent_streams = (ph_idx, pt_idx, nh_idx, nt_idx)   # ph, pt, nh, nt

  def issue_tile(tile_idx, slot):
    """Issue per-row gathers for the 4 entity streams of one batch tile."""
    base = tile_idx * tile_b
    if not isinstance(base, int):
      base = pl.multiple_of(base, tile_b)

    def issue_row(s, idx_ref, r):
      row = idx_ref[base + r]
      pltpu.make_async_copy(
          ent_hbm.at[pl.ds(row, 1), :],
          ebuf.at[slot, s, pl.ds(r, 1), :],
          sems.at[slot],
      ).start()

    for s, idx_ref in enumerate(ent_streams):
      if tile_b <= 64:
        for r in range(tile_b):                    # full static unroll
          issue_row(s, idx_ref, r)
      else:
        @pl.loop(0, tile_b // 8)
        def _(blk, s=s, idx_ref=idx_ref):          # 8-wide unrolled issue
          r0 = pl.multiple_of(blk * 8, 8)
          for u in range(8):
            issue_row(s, idx_ref, r0 + u)

  @pl.when(i == 0)
  def _():
    acc_ref[...] = jnp.zeros_like(acc_ref)
    issue_tile(0, 0)

  # Single full-slot wait: descriptor byte count (4*tile_b*D*4) equals the sum
  # of all row copies signaled on this slot's semaphore.
  cur = i & 1
  pltpu.make_async_copy(ebuf.at[cur], ebuf.at[cur], sems.at[cur]).wait()

  # Prefetch the next tile into the other slot (overlaps the compute below).
  @pl.when(i + 1 < n_tiles)
  def _():
    issue_tile(i + 1, 1 - cur)

  ph = ebuf[cur, 0]
  pt = ebuf[cur, 1]
  nh = ebuf[cur, 2]
  nt = ebuf[cur, 3]

  relnorm = relnorm_ref[...]
  prw = _onehot_gather(prc[...], relnorm)          # (tile_b, 2D): [rel | norm]
  nrw = _onehot_gather(nrc[...], relnorm)
  pr, pw = prw[:, :dim], prw[:, dim:]
  nr, nw = nrw[:, :dim], nrw[:, dim:]

  rows = i * tile_b + jax.lax.broadcasted_iota(jnp.int32, (tile_b, 1), 0)
  mask = (rows < batch).astype(jnp.float32)

  contrib = _tile_loss_contrib(ph, pr, pt, pw, nh, nr, nt, nw, mask,
                               margin=margin, alpha=alpha, p_norm=p_norm,
                               batch=batch, dim=dim)
  acc_ref[...] += jnp.reshape(contrib, (1, 1))

  @pl.when(i == n_tiles - 1)
  def _():
    out_ref[...] = (acc_ref[...] - (4.0 * alpha / 3.0)).astype(out_ref.dtype)


# ----------------------------- JAX wrapper -----------------------------------
def _compiler_params(vmem_bytes_needed):
  limit = int(min(64 * 2**20, max(16 * 2**20, 2 * vmem_bytes_needed + (2 << 20))))
  return pltpu.CompilerParams(dimension_semantics=("arbitrary",),
                              vmem_limit_bytes=limit)


def transh_forward(ent_emb, rel_emb, norm_vec, pos_triplets, neg_triplets,
                   *, margin=4.0, alpha=0.01, p_norm=1, tile_b=None,
                   ent_resident=None):
  """Equivalent of TransH.forward(pos_triplets, neg_triplets) -> scalar loss."""
  B = int(pos_triplets.shape[0])
  E, D = int(ent_emb.shape[0]), int(ent_emb.shape[1])
  R = int(rel_emb.shape[0])

  ent_emb = ent_emb.astype(jnp.float32)
  # relation + hyperplane tables merged into one (R, 2D) VMEM-resident table
  relnorm = jnp.concatenate(
      [rel_emb.astype(jnp.float32), norm_vec.astype(jnp.float32)], axis=1)
  r_pad = ((R + 7) // 8) * 8
  if r_pad != R:
    relnorm = jnp.pad(relnorm, ((0, r_pad - R), (0, 0)))

  if ent_resident is None:
    # one-hot MXU gather only pays off for small entity tables
    ent_resident = (E <= 1024) and (E * D * 4 <= 2 * 2**20)

  if tile_b is None:
    cap = 256 if ent_resident else 1024
    tile_b = max(8, min(cap, ((B + 7) // 8) * 8))
    if not ent_resident:
      # keep the double-buffered entity gather scratch under ~16 MiB
      vmem_rows = max(8, ((16 * 2**20) // (2 * 4 * D * 4) // 8) * 8)
      tile_b = min(tile_b, vmem_rows)
  assert tile_b % 8 == 0

  n_tiles = pl.cdiv(B, tile_b)
  padded = n_tiles * tile_b

  def col(trip, j):
    c = trip[:, j].astype(jnp.int32)
    return jnp.pad(c, (0, padded - B))          # padded rows masked in-kernel

  ph, pr, pt = col(pos_triplets, 0), col(pos_triplets, 1), col(pos_triplets, 2)
  nh, nr, nt = col(neg_triplets, 0), col(neg_triplets, 1), col(neg_triplets, 2)
  prc, nrc = pr.reshape(padded, 1), nr.reshape(padded, 1)

  kern_kw = dict(margin=float(margin), alpha=float(alpha),
                 p_norm=int(p_norm), batch=B)
  idx_spec = pl.BlockSpec((tile_b, 1), lambda i, *_: (i, 0))
  relnorm_spec = pl.BlockSpec((r_pad, 2 * D), lambda i, *_: (0, 0))
  out_spec = pl.BlockSpec((1, 1), lambda i, *_: (0, 0))

  if ent_resident:
    e_pad = ((E + 7) // 8) * 8
    ent_tbl = ent_emb if e_pad == E else jnp.pad(ent_emb,
                                                 ((0, e_pad - E), (0, 0)))
    phc, ptc = ph.reshape(padded, 1), pt.reshape(padded, 1)
    nhc, ntc = nh.reshape(padded, 1), nt.reshape(padded, 1)
    vmem_bytes = (2 * e_pad * D + 2 * r_pad * 2 * D + 12 * tile_b) * 4
    grid_spec = pltpu.PrefetchScalarGridSpec(
        num_scalar_prefetch=0,
        grid=(n_tiles,),
        in_specs=[idx_spec] * 6
                 + [pl.BlockSpec((e_pad, D), lambda i: (0, 0)), relnorm_spec],
        out_specs=out_spec,
        scratch_shapes=[pltpu.VMEM((1, 1), jnp.float32)])
    out = pl.pallas_call(
        functools.partial(_transh_resident_kernel, **kern_kw),
        out_shape=jax.ShapeDtypeStruct((1, 1), jnp.float32),
        grid_spec=grid_spec,
        compiler_params=_compiler_params(vmem_bytes),
        cost_estimate=pl.CostEstimate(
            flops=2 * padded * D * (2 * e_pad + 2 * r_pad + 30),
            transcendentals=0,
            bytes_accessed=(e_pad * D + r_pad * 2 * D + 6 * padded) * 4),
    )(phc, ptc, nhc, ntc, prc, nrc, ent_tbl, relnorm)
  else:
    vmem_bytes = (2 * 4 * tile_b * D + 2 * r_pad * 2 * D + 4 * tile_b) * 4
    grid_spec = pltpu.PrefetchScalarGridSpec(
        num_scalar_prefetch=4,
        grid=(n_tiles,),
        in_specs=[idx_spec, idx_spec,
                  pl.BlockSpec(memory_space=pl.ANY),    # entity table in HBM
                  relnorm_spec],
        out_specs=out_spec,
        scratch_shapes=[
            pltpu.VMEM((2, 4, tile_b, D), jnp.float32),  # double-buffered gather
            pltpu.SemaphoreType.DMA((2,)),               # one DMA sem per slot
            pltpu.VMEM((1, 1), jnp.float32),             # running loss sum
        ])
    out = pl.pallas_call(
        functools.partial(_transh_streaming_kernel, **kern_kw),
        out_shape=jax.ShapeDtypeStruct((1, 1), jnp.float32),
        grid_spec=grid_spec,
        compiler_params=_compiler_params(vmem_bytes),
        cost_estimate=pl.CostEstimate(
            flops=2 * padded * D * (2 * r_pad + 30),
            transcendentals=0,
            bytes_accessed=(4 * padded * D + r_pad * 2 * D + 6 * padded) * 4),
    )(ph, pt, nh, nt, prc, nrc, ent_emb, relnorm)

  return out[0, 0]


# ------------------------ Deterministic parameter init -----------------------
def xavier_l2_rows(key, n, dim):
  """xavier_uniform_ then F.normalize(p=2, dim=1), as in TransH.__init__."""
  bound = jnp.sqrt(6.0 / (n + dim))
  w = jax.random.uniform(key, (n, dim), jnp.float32, minval=-bound, maxval=bound)
  return w / jnp.linalg.norm(w, axis=1, keepdims=True)


def ref_forward(ent, rel, nv, pos, neg, margin=4.0, alpha=0.01):
  """Pure-JAX reference (same math as the PyTorch module, no Pallas)."""
  def dist(h_i, r_i, t_i):
    h, r, t, w = ent[h_i], rel[r_i], ent[t_i], nv[r_i]
    hp = h - jnp.sum(h * w, axis=1, keepdims=True) * w
    tp = t - jnp.sum(t * w, axis=1, keepdims=True) * w
    sc = hp + r - tp
    d = jnp.sum(jnp.abs(sc), axis=1)
    n = (jnp.mean(jnp.sum(jnp.abs(h), axis=1) - 1.0)
         + jnp.mean(r * r)
         + jnp.mean(jnp.sum(jnp.abs(t), axis=1) - 1.0)) / 3.0
    return d, n
  pd, pn = dist(pos[:, 0], pos[:, 1], pos[:, 2])
  nd, nn = dist(neg[:, 0], neg[:, 1], neg[:, 2])
  return jnp.mean(jnp.maximum(pd - nd + margin, 0.0)) + alpha * pn + alpha * nn


# ---------------------------------- main -------------------------------------
if __name__ == "__main__":
  ENT_NUM = 32
  REL_NUM = 8
  DIM = 128      # embedding dim (lane axis)
  BATCH = 20     # not a multiple of 8 -> exercises remainder masking

  root = jax.random.PRNGKey(0)
  k_ent, k_rel, k_nrm, k_pos, k_neg = jax.random.split(root, 5)

  ent_emb = xavier_l2_rows(k_ent, ENT_NUM, DIM)
  rel_emb = xavier_l2_rows(k_rel, REL_NUM, DIM)
  norm_vec = xavier_l2_rows(k_nrm, REL_NUM, DIM)

  kp1, kp2, kp3 = jax.random.split(k_pos, 3)
  pos_triplets = jnp.stack([
      jax.random.randint(kp1, (BATCH,), 0, ENT_NUM),
      jax.random.randint(kp2, (BATCH,), 0, REL_NUM),
      jax.random.randint(kp3, (BATCH,), 0, ENT_NUM),
  ], axis=1).astype(jnp.int32)

  kn1, kn2, kn3 = jax.random.split(k_neg, 3)
  neg_triplets = jnp.stack([
      jax.random.randint(kn1, (BATCH,), 0, ENT_NUM),
      jax.random.randint(kn2, (BATCH,), 0, REL_NUM),
      jax.random.randint(kn3, (BATCH,), 0, ENT_NUM),
  ], axis=1).astype(jnp.int32)

  ref = ref_forward(ent_emb, rel_emb, norm_vec, pos_triplets, neg_triplets,
                    margin=4.0, alpha=0.01)

  # 1) resident path: small tables fully in VMEM, one-hot MXU gather, no DMAs
  loss_res = transh_forward(ent_emb, rel_emb, norm_vec, pos_triplets,
                            neg_triplets, margin=4.0, alpha=0.01, p_norm=1,
                            tile_b=8, ent_resident=True)
  jax.block_until_ready(loss_res)
  assert bool(jnp.allclose(loss_res, ref, rtol=1e-4, atol=1e-4)), (loss_res, ref)

  # 2) streaming path: entity table in HBM, double-buffered row DMAs with the
  #    single full-slot wait (the general / large-table configuration)
  loss_str = transh_forward(ent_emb, rel_emb, norm_vec, pos_triplets,
                            neg_triplets, margin=4.0, alpha=0.01, p_norm=1,
                            tile_b=8, ent_resident=False)
  jax.block_until_ready(loss_str)
  assert bool(jnp.allclose(loss_str, ref, rtol=1e-4, atol=1e-4)), (loss_str, ref)

  print("KERNEL_OK")
</pallas_src>

<mosaic_0001>
module attributes {stable_mosaic.version = 11 : i64} {
  func.func @_transh_resident_kernel(%arg0: i32, %arg1: memref<8x1xi32, #tpu.memory_space<vmem>>, %arg2: memref<8x1xi32, #tpu.memory_space<vmem>>, %arg3: memref<8x1xi32, #tpu.memory_space<vmem>>, %arg4: memref<8x1xi32, #tpu.memory_space<vmem>>, %arg5: memref<8x1xi32, #tpu.memory_space<vmem>>, %arg6: memref<8x1xi32, #tpu.memory_space<vmem>>, %arg7: memref<32x128xf32, #tpu.memory_space<vmem>>, %arg8: memref<8x256xf32, #tpu.memory_space<vmem>>, %arg9: memref<1x1xf32, #tpu.memory_space<vmem>>, %arg10: memref<1x1xf32, #tpu.memory_space<vmem>>) attributes {dimension_semantics = [#tpu.dimension_semantics<arbitrary>], iteration_bounds = array<i64: 3>, scalar_prefetch = 0 : i64, scratch_operands = 1 : i64, tpu.core_type = #tpu.core_type<tc>, window_params = [{transform_indices = @transform_0, window_bounds = array<i64: 8, 1>}, {transform_indices = @transform_1, window_bounds = array<i64: 8, 1>}, {transform_indices = @transform_2, window_bounds = array<i64: 8, 1>}, {transform_indices = @transform_3, window_bounds = array<i64: 8, 1>}, {transform_indices = @transform_4, window_bounds = array<i64: 8, 1>}, {transform_indices = @transform_5, window_bounds = array<i64: 8, 1>}, {pipeline_mode = #tpu.pipeline_mode<synchronous>, transform_indices = @transform_6, window_bounds = array<i64: 32, 128>}, {pipeline_mode = #tpu.pipeline_mode<synchronous>, transform_indices = @transform_7, window_bounds = array<i64: 8, 256>}, {pipeline_mode = #tpu.pipeline_mode<synchronous>, transform_indices = @transform_8, window_bounds = array<i64: 1, 1>}]} {
    %c0_i32 = arith.constant 0 : i32
    %0 = arith.cmpi eq, %arg0, %c0_i32 : i32
    %1 = arith.extui %0 : i1 to i32
    %c0_i32_0 = arith.constant 0 : i32
    %2 = arith.cmpi ne, %1, %c0_i32_0 : i32
    scf.if %2 {
      %cst_47 = arith.constant 0.000000e+00 : f32
      %144 = vector.broadcast %cst_47 : f32 to vector<1x1xf32>
      %c0_48 = arith.constant 0 : index
      %c0_49 = arith.constant 0 : index
      %145 = vector.load %arg10[%c0_48, %c0_49] : memref<1x1xf32, #tpu.memory_space<vmem>>, vector<1x1xf32>
      tpu.vector_store %arg10[%c0_48, %c0_49], %144 {strides = array<i32>} : memref<1x1xf32, #tpu.memory_space<vmem>>, vector<1x1xf32>,
    } else {
    }
    %c0 = arith.constant 0 : index
    %c0_1 = arith.constant 0 : index
    %3 = vector.load %arg7[%c0, %c0_1] : memref<32x128xf32, #tpu.memory_space<vmem>>, vector<32x128xf32>
    %c0_2 = arith.constant 0 : index
    %c0_3 = arith.constant 0 : index
    %4 = vector.load %arg8[%c0_2, %c0_3] : memref<8x256xf32, #tpu.memory_space<vmem>>, vector<8x256xf32>
    %c0_4 = arith.constant 0 : index
    %c0_5 = arith.constant 0 : index
    %5 = vector.load %arg1[%c0_4, %c0_5] : memref<8x1xi32, #tpu.memory_space<vmem>>, vector<8x1xi32>
    %6 = tpu.iota {dimensions = array<i32: 1>} : vector<8x32xi32>
    %7 = vector.broadcast %5 : vector<8x1xi32> to vector<8x32xi32>
    %8 = arith.cmpi eq, %6, %7 : vector<8x32xi32>
    %9 = arith.extui %8 : vector<8x32xi1> to vector<8x32xi32>
    %10 = arith.sitofp %9 : vector<8x32xi32> to vector<8x32xf32>
    %cst = arith.constant dense<0.000000e+00> : vector<8x128xf32>
    %11 = tpu.matmul %10, %3, %cst {dimension_numbers = #tpu.dot_dimension_numbers<[1], [0], [0], [1], [0, 0, 1, 1], [], []>} : vector<8x32xf32>, vector<32x128xf32>, vector<8x128xf32> -> vector<8x128xf32>
    %c0_6 = arith.constant 0 : index
    %c0_7 = arith.constant 0 : index
    %12 = vector.load %arg2[%c0_6, %c0_7] : memref<8x1xi32, #tpu.memory_space<vmem>>, vector<8x1xi32>
    %13 = tpu.iota {dimensions = array<i32: 1>} : vector<8x32xi32>
    %14 = vector.broadcast %12 : vector<8x1xi32> to vector<8x32xi32>
    %15 = arith.cmpi eq, %13, %14 : vector<8x32xi32>
    %16 = arith.extui %15 : vector<8x32xi1> to vector<8x32xi32>
    %17 = arith.sitofp %16 : vector<8x32xi32> to vector<8x32xf32>
    %cst_8 = arith.constant dense<0.000000e+00> : vector<8x128xf32>
    %18 = tpu.matmul %17, %3, %cst_8 {dimension_numbers = #tpu.dot_dimension_numbers<[1], [0], [0], [1], [0, 0, 1, 1], [], []>} : vector<8x32xf32>, vector<32x128xf32>, vector<8x128xf32> -> vector<8x128xf32>
    %c0_9 = arith.constant 0 : index
    %c0_10 = arith.constant 0 : index
    %19 = vector.load %arg3[%c0_9, %c0_10] : memref<8x1xi32, #tpu.memory_space<vmem>>, vector<8x1xi32>
    %20 = tpu.iota {dimensions = array<i32: 1>} : vector<8x32xi32>
    %21 = vector.broadcast %19 : vector<8x1xi32> to vector<8x32xi32>
    %22 = arith.cmpi eq, %20, %21 : vector<8x32xi32>
    %23 = arith.extui %22 : vector<8x32xi1> to vector<8x32xi32>
    %24 = arith.sitofp %23 : vector<8x32xi32> to vector<8x32xf32>
    %cst_11 = arith.constant dense<0.000000e+00> : vector<8x128xf32>
    %25 = tpu.matmul %24, %3, %cst_11 {dimension_numbers = #tpu.dot_dimension_numbers<[1], [0], [0], [1], [0, 0, 1, 1], [], []>} : vector<8x32xf32>, vector<32x128xf32>, vector<8x128xf32> -> vector<8x128xf32>
    %c0_12 = arith.constant 0 : index
    %c0_13 = arith.constant 0 : index
    %26 = vector.load %arg4[%c0_12, %c0_13] : memref<8x1xi32, #tpu.memory_space<vmem>>, vector<8x1xi32>
    %27 = tpu.iota {dimensions = array<i32: 1>} : vector<8x32xi32>
    %28 = vector.broadcast %26 : vector<8x1xi32> to vector<8x32xi32>
    %29 = arith.cmpi eq, %27, %28 : vector<8x32xi32>
    %30 = arith.extui %29 : vector<8x32xi1> to vector<8x32xi32>
    %31 = arith.sitofp %30 : vector<8x32xi32> to vector<8x32xf32>
    %cst_14 = arith.constant dense<0.000000e+00> : vector<8x128xf32>
    %32 = tpu.matmul %31, %3, %cst_14 {dimension_numbers = #tpu.dot_dimension_numbers<[1], [0], [0], [1], [0, 0, 1, 1], [], []>} : vector<8x32xf32>, vector<32x128xf32>, vector<8x128xf32> -> vector<8x128xf32>
    %c0_15 = arith.constant 0 : index
    %c0_16 = arith.constant 0 : index
    %33 = vector.load %arg5[%c0_15, %c0_16] : memref<8x1xi32, #tpu.memory_space<vmem>>, vector<8x1xi32>
    %34 = tpu.iota {dimensions = array<i32: 1>} : vector<8x8xi32>
    %35 = vector.broadcast %33 : vector<8x1xi32> to vector<8x8xi32>
    %36 = arith.cmpi eq, %34, %35 : vector<8x8xi32>
    %37 = arith.extui %36 : vector<8x8xi1> to vector<8x8xi32>
    %38 = arith.sitofp %37 : vector<8x8xi32> to vector<8x8xf32>
    %cst_17 = arith.constant dense<0.000000e+00> : vector<8x256xf32>
    %39 = tpu.matmul %38, %4, %cst_17 {dimension_numbers = #tpu.dot_dimension_numbers<[1], [0], [0], [1], [0, 0, 1, 1], [], []>} : vector<8x8xf32>, vector<8x256xf32>, vector<8x256xf32> -> vector<8x256xf32>
    %c0_18 = arith.constant 0 : index
    %c0_19 = arith.constant 0 : index
    %40 = vector.load %arg6[%c0_18, %c0_19] : memref<8x1xi32, #tpu.memory_space<vmem>>, vector<8x1xi32>
    %41 = tpu.iota {dimensions = array<i32: 1>} : vector<8x8xi32>
    %42 = vector.broadcast %40 : vector<8x1xi32> to vector<8x8xi32>
    %43 = arith.cmpi eq, %41, %42 : vector<8x8xi32>
    %44 = arith.extui %43 : vector<8x8xi1> to vector<8x8xi32>
    %45 = arith.sitofp %44 : vector<8x8xi32> to vector<8x8xf32>
    %cst_20 = arith.constant dense<0.000000e+00> : vector<8x256xf32>
    %46 = tpu.matmul %45, %4, %cst_20 {dimension_numbers = #tpu.dot_dimension_numbers<[1], [0], [0], [1], [0, 0, 1, 1], [], []>} : vector<8x8xf32>, vector<8x256xf32>, vector<8x256xf32> -> vector<8x256xf32>
    %47 = vector.extract_strided_slice %39 {offsets = [0, 0], sizes = [8, 128], strides = [1, 1]} : vector<8x256xf32> to vector<8x128xf32>
    %48 = vector.extract_strided_slice %39 {offsets = [0, 128], sizes = [8, 128], strides = [1, 1]} : vector<8x256xf32> to vector<8x128xf32>
    %49 = vector.extract_strided_slice %46 {offsets = [0, 0], sizes = [8, 128], strides = [1, 1]} : vector<8x256xf32> to vector<8x128xf32>
    %50 = vector.extract_strided_slice %46 {offsets = [0, 128], sizes = [8, 128], strides = [1, 1]} : vector<8x256xf32> to vector<8x128xf32>
    %c8_i32 = arith.constant 8 : i32
    %51 = arith.muli %arg0, %c8_i32 : i32
    %52 = tpu.iota {dimensions = array<i32: 0>} : vector<8x1xi32>
    %53 = vector.broadcast %51 : i32 to vector<8x1xi32>
    %54 = arith.addi %53, %52 : vector<8x1xi32>
    %c20_i32 = arith.constant 20 : i32
    %55 = vector.broadcast %c20_i32 : i32 to vector<8x1xi32>
    %56 = arith.cmpi slt, %54, %55 : vector<8x1xi32>
    %57 = arith.extui %56 : vector<8x1xi1> to vector<8x1xi32>
    %58 = arith.sitofp %57 : vector<8x1xi32> to vector<8x1xf32>
    %59 = arith.mulf %11, %48 : vector<8x128xf32>
    %cst_21 = arith.constant dense<0.000000e+00> : vector<8xf32>
    %60 = vector.multi_reduction <add>, %59, %cst_21 [1] : vector<8x128xf32> to vector<8xf32>
    %61 = vector.shape_cast %60 : vector<8xf32> to vector<8x1xf32>
    %62 = arith.mulf %18, %48 : vector<8x128xf32>
    %cst_22 = arith.constant dense<0.000000e+00> : vector<8xf32>
    %63 = vector.multi_reduction <add>, %62, %cst_22 [1] : vector<8x128xf32> to vector<8xf32>
    %64 = vector.shape_cast %63 : vector<8xf32> to vector<8x1xf32>
    %65 = arith.addf %11, %47 : vector<8x128xf32>
    %66 = arith.subf %65, %18 : vector<8x128xf32>
    %67 = arith.subf %61, %64 : vector<8x1xf32>
    %68 = vector.broadcast %67 : vector<8x1xf32> to vector<8x128xf32>
    %69 = arith.mulf %68, %48 : vector<8x128xf32>
    %70 = arith.subf %66, %69 : vector<8x128xf32>
    %71 = math.absf %70 : vector<8x128xf32>
    %cst_23 = arith.constant dense<0.000000e+00> : vector<8xf32>
    %72 = vector.multi_reduction <add>, %71, %cst_23 [1] : vector<8x128xf32> to vector<8xf32>
    %73 = vector.shape_cast %72 : vector<8xf32> to vector<8x1xf32>
    %74 = math.absf %11 : vector<8x128xf32>
    %cst_24 = arith.constant dense<0.000000e+00> : vector<8xf32>
    %75 = vector.multi_reduction <add>, %74, %cst_24 [1] : vector<8x128xf32> to vector<8xf32>
    %76 = vector.shape_cast %75 : vector<8xf32> to vector<8x1xf32>
    %77 = math.absf %18 : vector<8x128xf32>
    %cst_25 = arith.constant dense<0.000000e+00> : vector<8xf32>
    %78 = vector.multi_reduction <add>, %77, %cst_25 [1] : vector<8x128xf32> to vector<8xf32>
    %79 = vector.shape_cast %78 : vector<8xf32> to vector<8x1xf32>
    %80 = arith.addf %76, %79 : vector<8x1xf32>
    %81 = arith.mulf %47, %47 : vector<8x128xf32>
    %cst_26 = arith.constant dense<0.000000e+00> : vector<8xf32>
    %82 = vector.multi_reduction <add>, %81, %cst_26 [1] : vector<8x128xf32> to vector<8xf32>
    %83 = vector.shape_cast %82 : vector<8xf32> to vector<8x1xf32>
    %84 = arith.mulf %25, %50 : vector<8x128xf32>
    %cst_27 = arith.constant dense<0.000000e+00> : vector<8xf32>
    %85 = vector.multi_reduction <add>, %84, %cst_27 [1] : vector<8x128xf32> to vector<8xf32>
    %86 = vector.shape_cast %85 : vector<8xf32> to vector<8x1xf32>
    %87 = arith.mulf %32, %50 : vector<8x128xf32>
    %cst_28 = arith.constant dense<0.000000e+00> : vector<8xf32>
    %88 = vector.multi_reduction <add>, %87, %cst_28 [1] : vector<8x128xf32> to vector<8xf32>
    %89 = vector.shape_cast %88 : vector<8xf32> to vector<8x1xf32>
    %90 = arith.addf %25, %49 : vector<8x128xf32>
    %91 = arith.subf %90, %32 : vector<8x128xf32>
    %92 = arith.subf %86, %89 : vector<8x1xf32>
    %93 = vector.broadcast %92 : vector<8x1xf32> to vector<8x128xf32>
    %94 = arith.mulf %93, %50 : vector<8x128xf32>
    %95 = arith.subf %91, %94 : vector<8x128xf32>
    %96 = math.absf %95 : vector<8x128xf32>
    %cst_29 = arith.constant dense<0.000000e+00> : vector<8xf32>
    %97 = vector.multi_reduction <add>, %96, %cst_29 [1] : vector<8x128xf32> to vector<8xf32>
    %98 = vector.shape_cast %97 : vector<8xf32> to vector<8x1xf32>
    %99 = math.absf %25 : vector<8x128xf32>
    %cst_30 = arith.constant dense<0.000000e+00> : vector<8xf32>
    %100 = vector.multi_reduction <add>, %99, %cst_30 [1] : vector<8x128xf32> to vector<8xf32>
    %101 = vector.shape_cast %100 : vector<8xf32> to vector<8x1xf32>
    %102 = math.absf %32 : vector<8x128xf32>
    %cst_31 = arith.constant dense<0.000000e+00> : vector<8xf32>
    %103 = vector.multi_reduction <add>, %102, %cst_31 [1] : vector<8x128xf32> to vector<8xf32>
    %104 = vector.shape_cast %103 : vector<8xf32> to vector<8x1xf32>
    %105 = arith.addf %101, %104 : vector<8x1xf32>
    %106 = arith.mulf %49, %49 : vector<8x128xf32>
    %cst_32 = arith.constant dense<0.000000e+00> : vector<8xf32>
    %107 = vector.multi_reduction <add>, %106, %cst_32 [1] : vector<8x128xf32> to vector<8xf32>
    %108 = vector.shape_cast %107 : vector<8xf32> to vector<8x1xf32>
    %109 = arith.subf %73, %98 : vector<8x1xf32>
    %cst_33 = arith.constant 4.000000e+00 : f32
    %110 = vector.broadcast %cst_33 : f32 to vector<8x1xf32>
    %111 = arith.addf %109, %110 : vector<8x1xf32>
    %cst_34 = arith.constant 0.000000e+00 : f32
    %112 = vector.broadcast %cst_34 : f32 to vector<8x1xf32>
    %113 = arith.maximumf %111, %112 : vector<8x1xf32>
    %114 = arith.mulf %113, %58 : vector<8x1xf32>
    %115 = vector.shape_cast %114 : vector<8x1xf32> to vector<1x8x1xf32>
    %cst_35 = arith.constant dense<0.000000e+00> : vector<1xf32>
    %116 = vector.multi_reduction <add>, %115, %cst_35 [1, 2] : vector<1x8x1xf32> to vector<1xf32>
    %117 = vector.shape_cast %116 : vector<1xf32> to vector<1x1x1xf32>
    %118 = vector.extract %117[0, 0, 0] : f32 from vector<1x1x1xf32>
    %cst_36 = arith.constant 5.000000e-02 : f32
    %119 = arith.mulf %118, %cst_36 : f32
    %120 = arith.addf %80, %105 : vector<8x1xf32>
    %121 = arith.mulf %120, %58 : vector<8x1xf32>
    %122 = vector.shape_cast %121 : vector<8x1xf32> to vector<1x8x1xf32>
    %cst_37 = arith.constant dense<0.000000e+00> : vector<1xf32>
    %123 = vector.multi_reduction <add>, %122, %cst_37 [1, 2] : vector<1x8x1xf32> to vector<1xf32>
    %124 = vector.shape_cast %123 : vector<1xf32> to vector<1x1x1xf32>
    %125 = vector.extract %124[0, 0, 0] : f32 from vector<1x1x1xf32>
    %cst_38 = arith.constant 5.000000e-02 : f32
    %126 = arith.mulf %125, %cst_38 : f32
    %127 = arith.addf %83, %108 : vector<8x1xf32>
    %128 = arith.mulf %127, %58 : vector<8x1xf32>
    %129 = vector.shape_cast %128 : vector<8x1xf32> to vector<1x8x1xf32>
    %cst_39 = arith.constant dense<0.000000e+00> : vector<1xf32>
    %130 = vector.multi_reduction <add>, %129, %cst_39 [1, 2] : vector<1x8x1xf32> to vector<1xf32>
    %131 = vector.shape_cast %130 : vector<1xf32> to vector<1x1x1xf32>
    %132 = vector.extract %131[0, 0, 0] : f32 from vector<1x1x1xf32>
    %cst_40 = arith.constant 3.906250e-04 : f32
    %133 = arith.mulf %132, %cst_40 : f32
    %134 = arith.addf %126, %133 : f32
    %cst_41 = arith.constant 0.00333333341 : f32
    %135 = arith.mulf %cst_41, %134 : f32
    %136 = arith.addf %119, %135 : f32
    %c0_42 = arith.constant 0 : index
    %c0_43 = arith.constant 0 : index
    %137 = vector.load %arg10[%c0_42, %c0_43] : memref<1x1xf32, #tpu.memory_space<vmem>>, vector<1x1xf32>
    %138 = vector.broadcast %136 : f32 to vector<1x1xf32>
    %139 = arith.addf %137, %138 : vector<1x1xf32>
    %c0_44 = arith.constant 0 : index
    %c0_45 = arith.constant 0 : index
    %140 = vector.load %arg10[%c0_44, %c0_45] : memref<1x1xf32, #tpu.memory_space<vmem>>, vector<1x1xf32>
    tpu.vector_store %arg10[%c0_44, %c0_45], %139 {strides = array<i32>} : memref<1x1xf32, #tpu.memory_space<vmem>>, vector<1x1xf32>,
    %c2_i32 = arith.constant 2 : i32
    %141 = arith.cmpi eq, %arg0, %c2_i32 : i32
    %142 = arith.extui %141 : i1 to i32
    %c0_i32_46 = arith.constant 0 : i32
    %143 = arith.cmpi ne, %142, %c0_i32_46 : i32
    scf.if %143 {
      %c0_47 = arith.constant 0 : index
      %c0_48 = arith.constant 0 : index
      %144 = vector.load %arg10[%c0_47, %c0_48] : memref<1x1xf32, #tpu.memory_space<vmem>>, vector<1x1xf32>
      %cst_49 = arith.constant 0.0133333337 : f32
      %145 = vector.broadcast %cst_49 : f32 to vector<1x1xf32>
      %146 = arith.subf %144, %145 : vector<1x1xf32>
      %c0_50 = arith.constant 0 : index
      %c0_51 = arith.constant 0 : index
      %147 = vector.load %arg9[%c0_50, %c0_51] : memref<1x1xf32, #tpu.memory_space<vmem>>, vector<1x1xf32>
      tpu.vector_store %arg9[%c0_50, %c0_51], %146 {strides = array<i32>} : memref<1x1xf32, #tpu.memory_space<vmem>>, vector<1x1xf32>,
    } else {
    }
    return
  }
  func.func @transform_0(%arg0: i32) -> (i32, i32) {
    %c0_i32 = arith.constant 0 : i32
    %c0_i32_0 = arith.constant 0 : i32
    return %arg0, %c0_i32 : i32, i32
  }
  func.func @transform_1(%arg0: i32) -> (i32, i32) {
    %c0_i32 = arith.constant 0 : i32
    %c0_i32_0 = arith.constant 0 : i32
    return %arg0, %c0_i32 : i32, i32
  }
  func.func @transform_2(%arg0: i32) -> (i32, i32) {
    %c0_i32 = arith.constant 0 : i32
    %c0_i32_0 = arith.constant 0 : i32
    return %arg0, %c0_i32 : i32, i32
  }
  func.func @transform_3(%arg0: i32) -> (i32, i32) {
    %c0_i32 = arith.constant 0 : i32
    %c0_i32_0 = arith.constant 0 : i32
    return %arg0, %c0_i32 : i32, i32
  }
  func.func @transform_4(%arg0: i32) -> (i32, i32) {
    %c0_i32 = arith.constant 0 : i32
    %c0_i32_0 = arith.constant 0 : i32
    return %arg0, %c0_i32 : i32, i32
  }
  func.func @transform_5(%arg0: i32) -> (i32, i32) {
    %c0_i32 = arith.constant 0 : i32
    %c0_i32_0 = arith.constant 0 : i32
    return %arg0, %c0_i32 : i32, i32
  }
  func.func @transform_6(%arg0: i32) -> (i32, i32) {
    %c0_i32 = arith.constant 0 : i32
    %c0_i32_0 = arith.constant 0 : i32
    %c0_i32_1 = arith.constant 0 : i32
    return %c0_i32, %c0_i32_0 : i32, i32
  }
  func.func @transform_7(%arg0: i32) -> (i32, i32) {
    %c0_i32 = arith.constant 0 : i32
    %c0_i32_0 = arith.constant 0 : i32
    %c0_i32_1 = arith.constant 0 : i32
    return %c0_i32, %c0_i32_0 : i32, i32
  }
  func.func @transform_8(%arg0: i32) -> (i32, i32) {
    %c0_i32 = arith.constant 0 : i32
    %c0_i32_0 = arith.constant 0 : i32
    %c0_i32_1 = arith.constant 0 : i32
    return %c0_i32, %c0_i32_0 : i32, i32
  }
}

</mosaic_0001>

<llo_original>
// kernel: tpu_custom_call.1
$region0: #{tpu_custom_call.1}
  #allocation0 [shape = 'u32[]', space=smem, size = 0x4, offset = 0x4, fixed_abs, tag = 'smem constant byte address 0x4 - core index']
  #allocation1 [shape = 'u32[144,128]{1,0:T(1,128)}', space=vmem, size = 0x12000, scoped, tag = 'internal scratch']
  #allocation2 [shape = 'f32[1,1]{1,0:T(1,128)}', space=vmem, size = 0x200, scoped, tag = 'scratch operand']
  %s0 = inlined_call_operand.vmem [shape: s32[24,1], index: 0, kind: input, shape index: {}]
  %s1 = inlined_call_operand.vmem [shape: s32[24,1], index: 1, kind: input, shape index: {}]
  %s2 = inlined_call_operand.vmem [shape: s32[24,1], index: 2, kind: input, shape index: {}]
  %s3 = inlined_call_operand.vmem [shape: s32[24,1], index: 3, kind: input, shape index: {}]
  %s4 = inlined_call_operand.vmem [shape: s32[24,1], index: 4, kind: input, shape index: {}]
  %s5 = inlined_call_operand.vmem [shape: s32[24,1], index: 5, kind: input, shape index: {}]
  %s6 = inlined_call_operand.vmem [shape: f32[32,128], index: 6, kind: input, shape index: {}]
  %s7 = inlined_call_operand.vmem [shape: f32[8,256], index: 7, kind: input, shape index: {}]
  %s8 = inlined_call_operand.hbm [shape: f32[1,1], index: 8, kind: output, shape index: {}]
  %s9 = sld [smem:[#allocation0]]
  $region73: #{tpu_custom_call.1} parent=0
    _
  %s11 = ssub.s32 1, %s9
  %s12 = scalar_select 0, %s11, %s9
  $region1: #{tpu_custom_call.1} parent=0
    #allocation3 [shape = 'u8[512]{0}', space=vmem, size = 0x400, scoped, tag = 'output window, operand 0, single buffered']
    #allocation4 [shape = 's32[2]{0}', space=sflag, size = 0x8, scoped, tag = 'scoped memory for tpu_custom_call.1']
    %13 = vsyncpa [#allocation4], 0
    loop: start=0, step=1, limit=5
    $region2: #{tpu_custom_call.1} parent=1 // loop_pre_header
      _
    $region3: #{tpu_custom_call.1} parent=1 // loop_header
      %s15 = sphi 0, %s19
      %p16 = scmp.ge.s32.totalorder %s15, 5
      %s25 = sphi 0, %s27
      %s28 = sphi 0, %s25
      %s29 = sphi 0, %s28
      %s45 = sphi 0, %s29
      %s51 = sphi 0, %s53
      %s54 = sphi 0, %s51
      %s55 = sphi 0, %s54
      %s71 = sphi 0, %s55
      %s77 = sphi 0, %s79
      %s80 = sphi 0, %s77
      %s81 = sphi 0, %s80
      %s97 = sphi 0, %s81
      %s103 = sphi 0, %s105
      %s106 = sphi 0, %s103
      %s107 = sphi 0, %s106
      %s123 = sphi 0, %s107
      %s129 = sphi 0, %s131
      %s132 = sphi 0, %s129
      %s133 = sphi 0, %s132
      %s149 = sphi 0, %s133
      %s155 = sphi 0, %s157
      %s158 = sphi 0, %s155
      %s159 = sphi 0, %s158
      %s175 = sphi 0, %s159
      %s179 = sphi 0, %s179
      %s181 = sphi 0, %s179
      %s182 = sphi 0, %s181
      %s196 = sphi 0, %s182
      %s200 = sphi 0, %s200
      %s202 = sphi 0, %s200
      %s203 = sphi 0, %s202
      %s217 = sphi 0, %s203
      %s221 = sphi 0, %s221
      %s223 = sphi 0, %s221
      %s224 = sphi 0, %s223
      %s238 = sphi 0, %s224
    $region4: #{tpu_custom_call.1} parent=1 // loop_header_branch
      %18 = sbr.rel (%p16) target = $region8
    $region5: #{tpu_custom_call.1} parent=1 // loop_body
      %s20 = ssub.s32 %s15, 1
      %s21 = ssub.s32 %s15, 2
      %s22 = sadd.s32 %s15, 1
      %s23 = ssub.s32 %s15, %s22
      %p24 = scmp.eq.s32.totalorder %s23, 0
      %s26 = sadd.s32 %s25, 1
      %s27 = scalar_select %p24, %s25, %s26
      %p30 = pneg %p24
      %p31 = scmp.eq.s32.totalorder %s15, 2
      %p32 = por %p30, %p31
      %p33 = scmp.ne.s32.totalorder %s25, %s28
      %p34 = scmp.eq.s32.totalorder %s15, 0
      %p35 = por %p33, %p34
      %p36 = scmp.ne.s32.totalorder %s25, %s28
      %p37 = scmp.eq.s32.totalorder %s20, 2
      %p38 = por %p36, %p37
      %p39 = scmp.ne.s32.totalorder %s28, %s29
      %p40 = scmp.eq.s32.totalorder %s20, 0
      %p41 = por %p39, %p40
      %p42 = scmp.ne.s32.totalorder %s28, %s29
      %p43 = scmp.eq.s32.totalorder %s21, 2
      %p44 = por %p42, %p43
      %p46 = scmp.ne.s32.totalorder %s29, %s45
      %p47 = scmp.eq.s32.totalorder %s21, 0
      %p48 = por %p46, %p47
      %s49 = ssub.s32 %s15, %s22
      %p50 = scmp.eq.s32.totalorder %s49, 0
      %s52 = sadd.s32 %s51, 1
      %s53 = scalar_select %p50, %s51, %s52
      %p56 = pneg %p50
      %p57 = scmp.eq.s32.totalorder %s15, 2
      %p58 = por %p56, %p57
      %p59 = scmp.ne.s32.totalorder %s51, %s54
      %p60 = scmp.eq.s32.totalorder %s15, 0
      %p61 = por %p59, %p60
      %p62 = scmp.ne.s32.totalorder %s51, %s54
      %p63 = scmp.eq.s32.totalorder %s20, 2
      %p64 = por %p62, %p63
      %p65 = scmp.ne.s32.totalorder %s54, %s55
      %p66 = scmp.eq.s32.totalorder %s20, 0
      %p67 = por %p65, %p66
      %p68 = scmp.ne.s32.totalorder %s54, %s55
      %p69 = scmp.eq.s32.totalorder %s21, 2
      %p70 = por %p68, %p69
      %p72 = scmp.ne.s32.totalorder %s55, %s71
      %p73 = scmp.eq.s32.totalorder %s21, 0
      %p74 = por %p72, %p73
      %s75 = ssub.s32 %s15, %s22
      %p76 = scmp.eq.s32.totalorder %s75, 0
      %s78 = sadd.s32 %s77, 1
      %s79 = scalar_select %p76, %s77, %s78
      %p82 = pneg %p76
      %p83 = scmp.eq.s32.totalorder %s15, 2
      %p84 = por %p82, %p83
      %p85 = scmp.ne.s32.totalorder %s77, %s80
      %p86 = scmp.eq.s32.totalorder %s15, 0
      %p87 = por %p85, %p86
      %p88 = scmp.ne.s32.totalorder %s77, %s80
      %p89 = scmp.eq.s32.totalorder %s20, 2
      %p90 = por %p88, %p89
      %p91 = scmp.ne.s32.totalorder %s80, %s81
      %p92 = scmp.eq.s32.totalorder %s20, 0
      %p93 = por %p91, %p92
      %p94 = scmp.ne.s32.totalorder %s80, %s81
      %p95 = scmp.eq.s32.totalorder %s21, 2
      %p96 = por %p94, %p95
      %p98 = scmp.ne.s32.totalorder %s81, %s97
      %p99 = scmp.eq.s32.totalorder %s21, 0
      %p100 = por %p98, %p99
      %s101 = ssub.s32 %s15, %s22
      %p102 = scmp.eq.s32.totalorder %s101, 0
      %s104 = sadd.s32 %s103, 1
      %s105 = scalar_select %p102, %s103, %s104
      %p108 = pneg %p102
      %p109 = scmp.eq.s32.totalorder %s15, 2
      %p110 = por %p108, %p109
      %p111 = scmp.ne.s32.totalorder %s103, %s106
      %p112 = scmp.eq.s32.totalorder %s15, 0
      %p113 = por %p111, %p112
      %p114 = scmp.ne.s32.totalorder %s103, %s106
      %p115 = scmp.eq.s32.totalorder %s20, 2
      %p116 = por %p114, %p115
      %p117 = scmp.ne.s32.totalorder %s106, %s107
      %p118 = scmp.eq.s32.totalorder %s20, 0
      %p119 = por %p117, %p118
      %p120 = scmp.ne.s32.totalorder %s106, %s107
      %p121 = scmp.eq.s32.totalorder %s21, 2
      %p122 = por %p120, %p121
      %p124 = scmp.ne.s32.totalorder %s107, %s123
      %p125 = scmp.eq.s32.totalorder %s21, 0
      %p126 = por %p124, %p125
      %s127 = ssub.s32 %s15, %s22
      %p128 = scmp.eq.s32.totalorder %s127, 0
      %s130 = sadd.s32 %s129, 1
      %s131 = scalar_select %p128, %s129, %s130
      %p134 = pneg %p128
      %p135 = scmp.eq.s32.totalorder %s15, 2
      %p136 = por %p134, %p135
      %p137 = scmp.ne.s32.totalorder %s129, %s132
      %p138 = scmp.eq.s32.totalorder %s15, 0
      %p139 = por %p137, %p138
      %p140 = scmp.ne.s32.totalorder %s129, %s132
      %p141 = scmp.eq.s32.totalorder %s20, 2
      %p142 = por %p140, %p141
      %p143 = scmp.ne.s32.totalorder %s132, %s133
      %p144 = scmp.eq.s32.totalorder %s20, 0
      %p145 = por %p143, %p144
      %p146 = scmp.ne.s32.totalorder %s132, %s133
      %p147 = scmp.eq.s32.totalorder %s21, 2
      %p148 = por %p146, %p147
      %p150 = scmp.ne.s32.totalorder %s133, %s149
      %p151 = scmp.eq.s32.totalorder %s21, 0
      %p152 = por %p150, %p151
      %s153 = ssub.s32 %s15, %s22
      %p154 = scmp.eq.s32.totalorder %s153, 0
      %s156 = sadd.s32 %s155, 1
      %s157 = scalar_select %p154, %s155, %s156
      %p160 = pneg %p154
      %p161 = scmp.eq.s32.totalorder %s15, 2
      %p162 = por %p160, %p161
      %p163 = scmp.ne.s32.totalorder %s155, %s158
      %p164 = scmp.eq.s32.totalorder %s15, 0
      %p165 = por %p163, %p164
      %p166 = scmp.ne.s32.totalorder %s155, %s158
      %p167 = scmp.eq.s32.totalorder %s20, 2
      %p168 = por %p166, %p167
      %p169 = scmp.ne.s32.totalorder %s158, %s159
      %p170 = scmp.eq.s32.totalorder %s20, 0
      %p171 = por %p169, %p170
      %p172 = scmp.ne.s32.totalorder %s158, %s159
      %p173 = scmp.eq.s32.totalorder %s21, 2
      %p174 = por %p172, %p173
      %p176 = scmp.ne.s32.totalorder %s159, %s175
      %p177 = scmp.eq.s32.totalorder %s21, 0
      %p178 = por %p176, %p177
      %s180 = sadd.s32 %s179, 1
      %p183 = scmp.eq.s32.totalorder %s15, 2
      %p184 = scmp.ne.s32.totalorder %s179, %s181
      %p185 = scmp.eq.s32.totalorder %s15, 0
      %p186 = por %p184, %p185
      %p187 = scmp.ne.s32.totalorder %s179, %s181
      %p188 = scmp.eq.s32.totalorder %s20, 2
      %p189 = por %p187, %p188
      %p190 = scmp.ne.s32.totalorder %s181, %s182
      %p191 = scmp.eq.s32.totalorder %s20, 0
      %p192 = por %p190, %p191
      %p193 = scmp.ne.s32.totalorder %s181, %s182
      %p194 = scmp.eq.s32.totalorder %s21, 2
      %p195 = por %p193, %p194
      %p197 = scmp.ne.s32.totalorder %s182, %s196
      %p198 = scmp.eq.s32.totalorder %s21, 0
      %p199 = por %p197, %p198
      %s201 = sadd.s32 %s200, 1
      %p204 = scmp.eq.s32.totalorder %s15, 2
      %p205 = scmp.ne.s32.totalorder %s200, %s202
      %p206 = scmp.eq.s32.totalorder %s15, 0
      %p207 = por %p205, %p206
      %p208 = scmp.ne.s32.totalorder %s200, %s202
      %p209 = scmp.eq.s32.totalorder %s20, 2
      %p210 = por %p208, %p209
      %p211 = scmp.ne.s32.totalorder %s202, %s203
      %p212 = scmp.eq.s32.totalorder %s20, 0
      %p213 = por %p211, %p212
      %p214 = scmp.ne.s32.totalorder %s202, %s203
      %p215 = scmp.eq.s32.totalorder %s21, 2
      %p216 = por %p214, %p215
      %p218 = scmp.ne.s32.totalorder %s203, %s217
      %p219 = scmp.eq.s32.totalorder %s21, 0
      %p220 = por %p218, %p219
      %s222 = sadd.s32 %s221, 1
      %p225 = scmp.eq.s32.totalorder %s15, 2
      %p226 = scmp.ne.s32.totalorder %s221, %s223
      %p227 = scmp.eq.s32.totalorder %s15, 0
      %p228 = por %p226, %p227
      %p229 = scmp.ne.s32.totalorder %s221, %s223
      %p230 = scmp.eq.s32.totalorder %s20, 2
      %p231 = por %p229, %p230
      %p232 = scmp.ne.s32.totalorder %s223, %s224
      %p233 = scmp.eq.s32.totalorder %s20, 0
      %p234 = por %p232, %p233
      %p235 = scmp.ne.s32.totalorder %s223, %s224
      %p236 = scmp.eq.s32.totalorder %s21, 2
      %p237 = por %p235, %p236
      %p239 = scmp.ne.s32.totalorder %s224, %s238
      %p240 = scmp.eq.s32.totalorder %s21, 0
      %p241 = por %p239, %p240
      %p242 = scmp.le.s32.totalorder 1, %s15
      %p243 = scmp.lt.s32.totalorder %s15, 4
      %p244 = pnand %p242, %p243
      %p245 = pneg %p244
      // Predicated region
      $region9: #{tpu_custom_call.1} parent=5 // pred_check
        _
      $region10: #{tpu_custom_call.1} parent=5 // pred_check_branch
        %247 = sbr.rel (%p244) target = $region12
      $region11: #{tpu_custom_call.1} parent=5 // pred_region
        %s248 = ssub.s32 %s15, 1
        // Predicated region
        $region13: #{tpu_custom_call.1} parent=11 // pred_check
          %p249 = pneg %p192
        $region14: #{tpu_custom_call.1} parent=11 // pred_check_branch
          %251 = sbr.rel (%p249) target = $region16
        $region15: #{tpu_custom_call.1} parent=11 // pred_region
          _
        $region16: #{tpu_custom_call.1} parent=11 // pred_fallthru
          _
        // Predicated region
        $region17: #{tpu_custom_call.1} parent=11 // pred_check
          %p252 = pneg %p213
        $region18: #{tpu_custom_call.1} parent=11 // pred_check_branch
          %254 = sbr.rel (%p252) target = $region20
        $region19: #{tpu_custom_call.1} parent=11 // pred_region
          _
        $region20: #{tpu_custom_call.1} parent=11 // pred_fallthru
          _
      $region12: #{tpu_custom_call.1} parent=5 // pred_fallthru
        _
      %p255 = scmp.lt.s32.totalorder %s15, 3
      // Predicated region
      $region21: #{tpu_custom_call.1} parent=5 // pred_check
        %p256 = pneg %p255
      $region22: #{tpu_custom_call.1} parent=5 // pred_check_branch
        %258 = sbr.rel (%p256) target = $region24
      $region23: #{tpu_custom_call.1} parent=5 // pred_region
        // Predicated region
        $region25: #{tpu_custom_call.1} parent=23 // pred_check
          %p259 = pneg %p35
        $region26: #{tpu_custom_call.1} parent=23 // pred_check_branch
          %261 = sbr.rel (%p259) target = $region28
        $region27: #{tpu_custom_call.1} parent=23 // pred_region
          %p262 = scmp.lt.s32.totalorder %s15, 2
          %s263 = scalar_select %p262, %s15, 2
          %s264 = smul.addr %s263, 8
          %s265 = scalar_lea.vmem %s0, %s264
        $region28: #{tpu_custom_call.1} parent=23 // pred_fallthru
          _
        // Predicated region
        $region29: #{tpu_custom_call.1} parent=23 // pred_check
          %p266 = pneg %p61
        $region30: #{tpu_custom_call.1} parent=23 // pred_check_branch
          %268 = sbr.rel (%p266) target = $region32
        $region31: #{tpu_custom_call.1} parent=23 // pred_region
          %p269 = scmp.lt.s32.totalorder %s15, 2
          %s270 = scalar_select %p269, %s15, 2
          %s271 = smul.addr %s270, 8
          %s272 = scalar_lea.vmem %s1, %s271
        $region32: #{tpu_custom_call.1} parent=23 // pred_fallthru
          _
        // Predicated region
        $region33: #{tpu_custom_call.1} parent=23 // pred_check
          %p273 = pneg %p87
        $region34: #{tpu_custom_call.1} parent=23 // pred_check_branch
          %275 = sbr.rel (%p273) target = $region36
        $region35: #{tpu_custom_call.1} parent=23 // pred_region
          %p276 = scmp.lt.s32.totalorder %s15, 2
          %s277 = scalar_select %p276, %s15, 2
          %s278 = smul.addr %s277, 8
          %s279 = scalar_lea.vmem %s2, %s278
        $region36: #{tpu_custom_call.1} parent=23 // pred_fallthru
          _
        // Predicated region
        $region37: #{tpu_custom_call.1} parent=23 // pred_check
          %p280 = pneg %p113
        $region38: #{tpu_custom_call.1} parent=23 // pred_check_branch
          %282 = sbr.rel (%p280) target = $region40
        $region39: #{tpu_custom_call.1} parent=23 // pred_region
          %p283 = scmp.lt.s32.totalorder %s15, 2
          %s284 = scalar_select %p283, %s15, 2
          %s285 = smul.addr %s284, 8
          %s286 = scalar_lea.vmem %s3, %s285
        $region40: #{tpu_custom_call.1} parent=23 // pred_fallthru
          _
        // Predicated region
        $region41: #{tpu_custom_call.1} parent=23 // pred_check
          %p287 = pneg %p139
        $region42: #{tpu_custom_call.1} parent=23 // pred_check_branch
          %289 = sbr.rel (%p287) target = $region44
        $region43: #{tpu_custom_call.1} parent=23 // pred_region
          %p290 = scmp.lt.s32.totalorder %s15, 2
          %s291 = scalar_select %p290, %s15, 2
          %s292 = smul.addr %s291, 8
          %s293 = scalar_lea.vmem %s4, %s292
        $region44: #{tpu_custom_call.1} parent=23 // pred_fallthru
          _
        // Predicated region
        $region45: #{tpu_custom_call.1} parent=23 // pred_check
          %p294 = pneg %p165
        $region46: #{tpu_custom_call.1} parent=23 // pred_check_branch
          %296 = sbr.rel (%p294) target = $region48
        $region47: #{tpu_custom_call.1} parent=23 // pred_region
          %p297 = scmp.lt.s32.totalorder %s15, 2
          %s298 = scalar_select %p297, %s15, 2
          %s299 = smul.addr %s298, 8
          %s300 = scalar_lea.vmem %s5, %s299
        $region48: #{tpu_custom_call.1} parent=23 // pred_fallthru
          _
      $region24: #{tpu_custom_call.1} parent=5 // pred_fallthru
        _
      %p301 = scmp.le.s32.totalorder 1, %s15
      %p302 = scmp.lt.s32.totalorder %s15, 4
      %p303 = pnand %p301, %p302
      %p304 = pneg %p303
      // Predicated region
      $region49: #{tpu_custom_call.1} parent=5 // pred_check
        _
      $region50: #{tpu_custom_call.1} parent=5 // pred_check_branch
        %306 = sbr.rel (%p303) target = $region52
      $region51: #{tpu_custom_call.1} parent=5 // pred_region
        %s307 = ssub.s32 %s15, 1
        %p308 = scmp.lt.s32.totalorder %s20, 2
        %s309 = scalar_select %p308, %s20, 2
        %s310 = smul.addr %s309, 8
        %s311 = scalar_lea.vmem %s0, %s310
        %p312 = pneg %p41
        %p313 = pneg %p38
        %p314 = scmp.lt.s32.totalorder %s20, 2
        %s315 = scalar_select %p314, %s20, 2
        %s316 = smul.addr %s315, 8
        %s317 = scalar_lea.vmem %s1, %s316
        %p318 = pneg %p67
        %p319 = pneg %p64
        %p320 = scmp.lt.s32.totalorder %s20, 2
        %s321 = scalar_select %p320, %s20, 2
        %s322 = smul.addr %s321, 8
        %s323 = scalar_lea.vmem %s2, %s322
        %p324 = pneg %p93
        %p325 = pneg %p90
        %p326 = scmp.lt.s32.totalorder %s20, 2
        %s327 = scalar_select %p326, %s20, 2
        %s328 = smul.addr %s327, 8
        %s329 = scalar_lea.vmem %s3, %s328
        %p330 = pneg %p119
        %p331 = pneg %p116
        %p332 = scmp.lt.s32.totalorder %s20, 2
        %s333 = scalar_select %p332, %s20, 2
        %s334 = smul.addr %s333, 8
        %s335 = scalar_lea.vmem %s4, %s334
        %p336 = pneg %p145
        %p337 = pneg %p142
        %p338 = scmp.lt.s32.totalorder %s20, 2
        %s339 = scalar_select %p338, %s20, 2
        %s340 = smul.addr %s339, 8
        %s341 = scalar_lea.vmem %s5, %s340
        %p342 = pneg %p171
        %p343 = pneg %p168
        %p344 = pneg %p192
        %p345 = pneg %p189
        %p346 = pneg %p213
        %p347 = pneg %p210
        %p348 = pneg %p234
        %p349 = pneg %p231
        %p350 = scmp.lt.s32.totalorder %s20, 2
        %s351 = scalar_select %p350, %s20, 2
        %s352 = smul.addr %s351, 8
        %s353 = scalar_lea.vmem %s0, %s352
        %p354 = scmp.lt.s32.totalorder %s20, 2
        %s355 = scalar_select %p354, %s20, 2
        %s356 = smul.addr %s355, 8
        %s357 = scalar_lea.vmem %s1, %s356
        %p358 = scmp.lt.s32.totalorder %s20, 2
        %s359 = scalar_select %p358, %s20, 2
        %s360 = smul.addr %s359, 8
        %s361 = scalar_lea.vmem %s2, %s360
        %p362 = scmp.lt.s32.totalorder %s20, 2
        %s363 = scalar_select %p362, %s20, 2
        %s364 = smul.addr %s363, 8
        %s365 = scalar_lea.vmem %s3, %s364
        %p366 = scmp.lt.s32.totalorder %s20, 2
        %s367 = scalar_select %p366, %s20, 2
        %s368 = smul.addr %s367, 8
        %s369 = scalar_lea.vmem %s4, %s368
        %p370 = scmp.lt.s32.totalorder %s20, 2
        %s371 = scalar_select %p370, %s20, 2
        %s372 = smul.addr %s371, 8
        %s373 = scalar_lea.vmem %s5, %s372
        %p374 = scmp.eq.s32.totalorder %s20, 0
        // Predicated region
        $region53: #{tpu_custom_call.1} parent=51 // pred_check
          %p375 = pneg %p374
        $region54: #{tpu_custom_call.1} parent=51 // pred_check_branch
          %377 = sbr.rel (%p375) target = $region56
        $region55: #{tpu_custom_call.1} parent=51 // pred_region
          %vm378 = vcmask 0
          %379 = vst.msk [vmem:[#allocation2] sm:$0x1] %vm378, 0.0
        $region56: #{tpu_custom_call.1} parent=51 // pred_fallthru
          _
        %v380 = vld [vmem:[%s6] sm:$0xff]
        %v381 = vld [vmem:[%s6 + $0x8] sm:$0xff]
        %v382 = vld [vmem:[%s6 + $0x10] sm:$0xff]
        %v383 = vld [vmem:[%s6 + $0x18] sm:$0xff]
        %v384 = vld [vmem:[%s7] sm:$0xff]
        %v385 = vld [vmem:[%s7 + $0x8] sm:$0xff]
        %v386 = vld [vmem:[%s353] sm:$0xff]
        %v387 = vlaneseq
        %v388 = vand.u32 %v387, 127
        %389 = vset.pattern.permute.xlu0 0
        %390 = vperm.xlu0 %389, %v386
        %v391 = vpop.permute.xlu0 %390
        %vm392 = vcmp.eq.s32.totalorder %v388, %v391
        %v393 = vsel %vm392, 1, 0
        %v394 = vcvt.s32.f32 %v393
        %vm395 = vcmask 261120
        %v397 = vsel %vm395, %v394, 0
        %399 = vmatprep.subr.mxu0 0.0
        %400 = vmatpush1.msra.mxu0 %v380
        %401 = vmatprep.subr.mxu0 0.0
        %402 = vmatpush1.msra.mxu0 %v381
        %403 = vmatprep.subr.mxu0 0.0
        %404 = vmatpush1.msra.mxu0 %v382
        %405 = vmatprep.subr.mxu0 0.0
        %406 = vmatpush1.msra.mxu0 %v383
        %407 = vmatprep.subr.mxu0 0.0
        %408 = vmatpush1.msra.mxu0 0.0
        %409 = vmatprep.subr.mxu0 0.0
        %410 = vmatpush1.msra.mxu0 0.0
        %411 = vmatprep.subr.mxu0 0.0
        %412 = vmatpush1.msra.mxu0 0.0
        %413 = vmatprep.subr.mxu0 0.0
        %414 = vmatpush1.msra.mxu0 0.0
        %415 = vmatprep.subr.mxu0 0.0
        %416 = vmatpush1.msra.mxu0 0.0
        %417 = vmatprep.subr.mxu0 0.0
        %418 = vmatpush1.msra.mxu0 0.0
        %419 = vmatprep.subr.mxu0 0.0
        %420 = vmatpush1.msra.mxu0 0.0
        %421 = vmatprep.subr.mxu0 0.0
        %422 = vmatpush1.msra.mxu0 0.0
        %423 = vmatprep.subr.mxu0 0.0
        %424 = vmatpush1.msra.mxu0 0.0
        %425 = vmatprep.subr.mxu0 0.0
        %426 = vmatpush1.msra.mxu0 0.0
        %427 = vmatprep.subr.mxu0 0.0
        %428 = vmatpush1.msra.mxu0 0.0
        %429 = vmatprep.subr.mxu0 0.0
        %430 = vmatpush1.msra.mxu0 0.0
        %431 = vmatprep.subr.mxu0 0.0
        %432 = vmatpush1.msra.mxu0 0.0
        %433 = vmatprep.subr.mxu0 0.0
        %434 = vmatpush1.msra.mxu0 0.0
        %435 = vmatprep.subr.mxu0 0.0
        %436 = vmatpush1.msra.mxu0 0.0
        %437 = vmatprep.subr.mxu0 0.0
        %438 = vmatpush1.msra.mxu0 0.0
        %439 = vmatprep.subr.mxu0 0.0
        %440 = vmatpush1.msra.mxu0 0.0
        %441 = vmatprep.subr.mxu0 0.0
        %442 = vmatpush1.msra.mxu0 0.0
        %443 = vmatprep.subr.mxu0 0.0
        %444 = vmatpush1.msra.mxu0 0.0
        %445 = vmatprep.subr.mxu0 0.0
        %446 = vmatpush1.msra.mxu0 0.0
        %447 = vmatprep.subr.mxu0 0.0
        %448 = vmatpush1.msra.mxu0 0.0
        %449 = vmatprep.subr.mxu0 0.0
        %450 = vmatpush1.msra.mxu0 0.0
        %451 = vmatprep.subr.mxu0 0.0
        %452 = vmatpush1.msra.mxu0 0.0
        %453 = vmatprep.subr.mxu0 0.0
        %454 = vmatpush1.msra.mxu0 0.0
        %455 = vmatprep.subr.mxu0 0.0
        %456 = vmatpush1.msra.mxu0 0.0
        %457 = vmatprep.subr.mxu0 0.0
        %458 = vmatpush1.msra.mxu0 0.0
        %459 = vmatprep.subr.mxu0 0.0
        %460 = vmatpush1.msra.mxu0 0.0
        %461 = vmatprep.subr.mxu0 0.0
        %462 = vmatpush1.msra.mxu0 0.0
        %463 = vmatprep.mubr.f32.mxu0 0.0
        %464 = vmatmul.mubr.f32.gmra.mrb[0].mxu0 %v397
        %v465 = vpop.f32.mrb[0].mxu0
        %v466 = vadd.f32 0.0, %v465
        %v467 = vpop.f32.mrb[0].mxu0
        %468 = vdwg.mxu0
        %v469 = vld [vmem:[%s357] sm:$0xff]
        %470 = vset.pattern.permute.xlu0 0
        %471 = vperm.xlu0 %470, %v469
        %v472 = vpop.permute.xlu0 %471
        %vm473 = vcmp.eq.s32.totalorder %v388, %v472
        %v474 = vsel %vm473, 1, 0
        %v475 = vcvt.s32.f32 %v474
        %v477 = vsel %vm395, %v475, 0
        %479 = vmatprep.subr.mxu0 0.0
        %480 = vmatpush1.msra.mxu0 %v380
        %481 = vmatprep.subr.mxu0 0.0
        %482 = vmatpush1.msra.mxu0 %v381
        %483 = vmatprep.subr.mxu0 0.0
        %484 = vmatpush1.msra.mxu0 %v382
        %485 = vmatprep.subr.mxu0 0.0
        %486 = vmatpush1.msra.mxu0 %v383
        %487 = vmatprep.subr.mxu0 0.0
        %488 = vmatpush1.msra.mxu0 0.0
        %489 = vmatprep.subr.mxu0 0.0
        %490 = vmatpush1.msra.mxu0 0.0
        %491 = vmatprep.subr.mxu0 0.0
        %492 = vmatpush1.msra.mxu0 0.0
        %493 = vmatprep.subr.mxu0 0.0
        %494 = vmatpush1.msra.mxu0 0.0
        %495 = vmatprep.subr.mxu0 0.0
        %496 = vmatpush1.msra.mxu0 0.0
        %497 = vmatprep.subr.mxu0 0.0
        %498 = vmatpush1.msra.mxu0 0.0
        %499 = vmatprep.subr.mxu0 0.0
        %500 = vmatpush1.msra.mxu0 0.0
        %501 = vmatprep.subr.mxu0 0.0
        %502 = vmatpush1.msra.mxu0 0.0
        %503 = vmatprep.subr.mxu0 0.0
        %504 = vmatpush1.msra.mxu0 0.0
        %505 = vmatprep.subr.mxu0 0.0
        %506 = vmatpush1.msra.mxu0 0.0
        %507 = vmatprep.subr.mxu0 0.0
        %508 = vmatpush1.msra.mxu0 0.0
        %509 = vmatprep.subr.mxu0 0.0
        %510 = vmatpush1.msra.mxu0 0.0
        %511 = vmatprep.subr.mxu0 0.0
        %512 = vmatpush1.msra.mxu0 0.0
        %513 = vmatprep.subr.mxu0 0.0
        %514 = vmatpush1.msra.mxu0 0.0
        %515 = vmatprep.subr.mxu0 0.0
        %516 = vmatpush1.msra.mxu0 0.0
        %517 = vmatprep.subr.mxu0 0.0
        %518 = vmatpush1.msra.mxu0 0.0
        %519 = vmatprep.subr.mxu0 0.0
        %520 = vmatpush1.msra.mxu0 0.0
        %521 = vmatprep.subr.mxu0 0.0
        %522 = vmatpush1.msra.mxu0 0.0
        %523 = vmatprep.subr.mxu0 0.0
        %524 = vmatpush1.msra.mxu0 0.0
        %525 = vmatprep.subr.mxu0 0.0
        %526 = vmatpush1.msra.mxu0 0.0
        %527 = vmatprep.subr.mxu0 0.0
        %528 = vmatpush1.msra.mxu0 0.0
        %529 = vmatprep.subr.mxu0 0.0
        %530 = vmatpush1.msra.mxu0 0.0
        %531 = vmatprep.subr.mxu0 0.0
        %532 = vmatpush1.msra.mxu0 0.0
        %533 = vmatprep.subr.mxu0 0.0
        %534 = vmatpush1.msra.mxu0 0.0
        %535 = vmatprep.subr.mxu0 0.0
        %536 = vmatpush1.msra.mxu0 0.0
        %537 = vmatprep.subr.mxu0 0.0
        %538 = vmatpush1.msra.mxu0 0.0
        %539 = vmatprep.subr.mxu0 0.0
        %540 = vmatpush1.msra.mxu0 0.0
        %541 = vmatprep.subr.mxu0 0.0
        %542 = vmatpush1.msra.mxu0 0.0
        %543 = vmatprep.mubr.f32.mxu0 0.0
        %544 = vmatmul.mubr.f32.gmra.mrb[0].mxu0 %v477
        %v545 = vpop.f32.mrb[0].mxu0
        %v546 = vadd.f32 0.0, %v545
        %v547 = vpop.f32.mrb[0].mxu0
        %548 = vdwg.mxu0
        %v549 = vld [vmem:[%s361] sm:$0xff]
        %550 = vset.pattern.permute.xlu0 0
        %551 = vperm.xlu0 %550, %v549
        %v552 = vpop.permute.xlu0 %551
        %vm553 = vcmp.eq.s32.totalorder %v388, %v552
        %v554 = vsel %vm553, 1, 0
        %v555 = vcvt.s32.f32 %v554
        %v557 = vsel %vm395, %v555, 0
        %559 = vmatprep.subr.mxu0 0.0
        %560 = vmatpush1.msra.mxu0 %v380
        %561 = vmatprep.subr.mxu0 0.0
        %562 = vmatpush1.msra.mxu0 %v381
        %563 = vmatprep.subr.mxu0 0.0
        %564 = vmatpush1.msra.mxu0 %v382
        %565 = vmatprep.subr.mxu0 0.0
        %566 = vmatpush1.msra.mxu0 %v383
        %567 = vmatprep.subr.mxu0 0.0
        %568 = vmatpush1.msra.mxu0 0.0
        %569 = vmatprep.subr.mxu0 0.0
        %570 = vmatpush1.msra.mxu0 0.0
        %571 = vmatprep.subr.mxu0 0.0
        %572 = vmatpush1.msra.mxu0 0.0
        %573 = vmatprep.subr.mxu0 0.0
        %574 = vmatpush1.msra.mxu0 0.0
        %575 = vmatprep.subr.mxu0 0.0
        %576 = vmatpush1.msra.mxu0 0.0
        %577 = vmatprep.subr.mxu0 0.0
        %578 = vmatpush1.msra.mxu0 0.0
        %579 = vmatprep.subr.mxu0 0.0
        %580 = vmatpush1.msra.mxu0 0.0
        %581 = vmatprep.subr.mxu0 0.0
        %582 = vmatpush1.msra.mxu0 0.0
        %583 = vmatprep.subr.mxu0 0.0
        %584 = vmatpush1.msra.mxu0 0.0
        %585 = vmatprep.subr.mxu0 0.0
        %586 = vmatpush1.msra.mxu0 0.0
        %587 = vmatprep.subr.mxu0 0.0
        %588 = vmatpush1.msra.mxu0 0.0
        %589 = vmatprep.subr.mxu0 0.0
        %590 = vmatpush1.msra.mxu0 0.0
        %591 = vmatprep.subr.mxu0 0.0
        %592 = vmatpush1.msra.mxu0 0.0
        %593 = vmatprep.subr.mxu0 0.0
        %594 = vmatpush1.msra.mxu0 0.0
        %595 = vmatprep.subr.mxu0 0.0
        %596 = vmatpush1.msra.mxu0 0.0
        %597 = vmatprep.subr.mxu0 0.0
        %598 = vmatpush1.msra.mxu0 0.0
        %599 = vmatprep.subr.mxu0 0.0
        %600 = vmatpush1.msra.mxu0 0.0
        %601 = vmatprep.subr.mxu0 0.0
        %602 = vmatpush1.msra.mxu0 0.0
        %603 = vmatprep.subr.mxu0 0.0
        %604 = vmatpush1.msra.mxu0 0.0
        %605 = vmatprep.subr.mxu0 0.0
        %606 = vmatpush1.msra.mxu0 0.0
        %607 = vmatprep.subr.mxu0 0.0
        %608 = vmatpush1.msra.mxu0 0.0
        %609 = vmatprep.subr.mxu0 0.0
        %610 = vmatpush1.msra.mxu0 0.0
        %611 = vmatprep.subr.mxu0 0.0
        %612 = vmatpush1.msra.mxu0 0.0
        %613 = vmatprep.subr.mxu0 0.0
        %614 = vmatpush1.msra.mxu0 0.0
        %615 = vmatprep.subr.mxu0 0.0
        %616 = vmatpush1.msra.mxu0 0.0
        %617 = vmatprep.subr.mxu0 0.0
        %618 = vmatpush1.msra.mxu0 0.0
        %619 = vmatprep.subr.mxu0 0.0
        %620 = vmatpush1.msra.mxu0 0.0
        %621 = vmatprep.subr.mxu0 0.0
        %622 = vmatpush1.msra.mxu0 0.0
        %623 = vmatprep.mubr.f32.mxu0 0.0
        %624 = vmatmul.mubr.f32.gmra.mrb[0].mxu0 %v557
        %v625 = vpop.f32.mrb[0].mxu0
        %v626 = vadd.f32 0.0, %v625
        %v627 = vpop.f32.mrb[0].mxu0
        %628 = vdwg.mxu0
        %v629 = vld [vmem:[%s365] sm:$0xff]
        %630 = vset.pattern.permute.xlu0 0
        %631 = vperm.xlu0 %630, %v629
        %v632 = vpop.permute.xlu0 %631
        %vm633 = vcmp.eq.s32.totalorder %v388, %v632
        %v634 = vsel %vm633, 1, 0
        %v635 = vcvt.s32.f32 %v634
        %v637 = vsel %vm395, %v635, 0
        %639 = vmatprep.subr.mxu0 0.0
        %640 = vmatpush1.msra.mxu0 %v380
        %641 = vmatprep.subr.mxu0 0.0
        %642 = vmatpush1.msra.mxu0 %v381
        %643 = vmatprep.subr.mxu0 0.0
        %644 = vmatpush1.msra.mxu0 %v382
        %645 = vmatprep.subr.mxu0 0.0
        %646 = vmatpush1.msra.mxu0 %v383
        %647 = vmatprep.subr.mxu0 0.0
        %648 = vmatpush1.msra.mxu0 0.0
        %649 = vmatprep.subr.mxu0 0.0
        %650 = vmatpush1.msra.mxu0 0.0
        %651 = vmatprep.subr.mxu0 0.0
        %652 = vmatpush1.msra.mxu0 0.0
        %653 = vmatprep.subr.mxu0 0.0
        %654 = vmatpush1.msra.mxu0 0.0
        %655 = vmatprep.subr.mxu0 0.0
        %656 = vmatpush1.msra.mxu0 0.0
        %657 = vmatprep.subr.mxu0 0.0
        %658 = vmatpush1.msra.mxu0 0.0
        %659 = vmatprep.subr.mxu0 0.0
        %660 = vmatpush1.msra.mxu0 0.0
        %661 = vmatprep.subr.mxu0 0.0
        %662 = vmatpush1.msra.mxu0 0.0
        %663 = vmatprep.subr.mxu0 0.0
        %664 = vmatpush1.msra.mxu0 0.0
        %665 = vmatprep.subr.mxu0 0.0
        %666 = vmatpush1.msra.mxu0 0.0
        %667 = vmatprep.subr.mxu0 0.0
        %668 = vmatpush1.msra.mxu0 0.0
        %669 = vmatprep.subr.mxu0 0.0
        %670 = vmatpush1.msra.mxu0 0.0
        %671 = vmatprep.subr.mxu0 0.0
        %672 = vmatpush1.msra.mxu0 0.0
        %673 = vmatprep.subr.mxu0 0.0
        %674 = vmatpush1.msra.mxu0 0.0
        %675 = vmatprep.subr.mxu0 0.0
        %676 = vmatpush1.msra.mxu0 0.0
        %677 = vmatprep.subr.mxu0 0.0
        %678 = vmatpush1.msra.mxu0 0.0
        %679 = vmatprep.subr.mxu0 0.0
        %680 = vmatpush1.msra.mxu0 0.0
        %681 = vmatprep.subr.mxu0 0.0
        %682 = vmatpush1.msra.mxu0 0.0
        %683 = vmatprep.subr.mxu0 0.0
        %684 = vmatpush1.msra.mxu0 0.0
        %685 = vmatprep.subr.mxu0 0.0
        %686 = vmatpush1.msra.mxu0 0.0
        %687 = vmatprep.subr.mxu0 0.0
        %688 = vmatpush1.msra.mxu0 0.0
        %689 = vmatprep.subr.mxu0 0.0
        %690 = vmatpush1.msra.mxu0 0.0
        %691 = vmatprep.subr.mxu0 0.0
        %692 = vmatpush1.msra.mxu0 0.0
        %693 = vmatprep.subr.mxu0 0.0
        %694 = vmatpush1.msra.mxu0 0.0
        %695 = vmatprep.subr.mxu0 0.0
        %696 = vmatpush1.msra.mxu0 0.0
        %697 = vmatprep.subr.mxu0 0.0
        %698 = vmatpush1.msra.mxu0 0.0
        %699 = vmatprep.subr.mxu0 0.0
        %700 = vmatpush1.msra.mxu0 0.0
        %701 = vmatprep.subr.mxu0 0.0
        %702 = vmatpush1.msra.mxu0 0.0
        %703 = vmatprep.mubr.f32.mxu0 0.0
        %704 = vmatmul.mubr.f32.gmra.mrb[0].mxu0 %v637
        %v705 = vpop.f32.mrb[0].mxu0
        %v706 = vadd.f32 0.0, %v705
        %v707 = vpop.f32.mrb[0].mxu0
        %708 = vdwg.mxu0
        %v709 = vld [vmem:[%s369] sm:$0xff]
        %710 = vset.pattern.permute.xlu0 0
        %711 = vperm.xlu0 %710, %v709
        %v712 = vpop.permute.xlu0 %711
        %vm713 = vcmp.eq.s32.totalorder %v388, %v712
        %v714 = vsel %vm713, 1, 0
        %v715 = vcvt.s32.f32 %v714
        %vm716 = vcmask 64512
        %v718 = vsel %vm716, %v715, 0
        %720 = vmatprep.subr.mxu0 %v385
        %721 = vmatpush1.msra.mxu0 %v384
        %722 = vmatprep.subr.mxu0 0.0
        %723 = vmatpush1.msra.mxu0 0.0
        %724 = vmatprep.subr.mxu0 0.0
        %725 = vmatpush1.msra.mxu0 0.0
        %726 = vmatprep.subr.mxu0 0.0
        %727 = vmatpush1.msra.mxu0 0.0
        %728 = vmatprep.subr.mxu0 0.0
        %729 = vmatpush1.msra.mxu0 0.0
        %730 = vmatprep.subr.mxu0 0.0
        %731 = vmatpush1.msra.mxu0 0.0
        %732 = vmatprep.subr.mxu0 0.0
        %733 = vmatpush1.msra.mxu0 0.0
        %734 = vmatprep.subr.mxu0 0.0
        %735 = vmatpush1.msra.mxu0 0.0
        %736 = vmatprep.subr.mxu0 0.0
        %737 = vmatpush1.msra.mxu0 0.0
        %738 = vmatprep.subr.mxu0 0.0
        %739 = vmatpush1.msra.mxu0 0.0
        %740 = vmatprep.subr.mxu0 0.0
        %741 = vmatpush1.msra.mxu0 0.0
        %742 = vmatprep.subr.mxu0 0.0
        %743 = vmatpush1.msra.mxu0 0.0
        %744 = vmatprep.subr.mxu0 0.0
        %745 = vmatpush1.msra.mxu0 0.0
        %746 = vmatprep.subr.mxu0 0.0
        %747 = vmatpush1.msra.mxu0 0.0
        %748 = vmatprep.subr.mxu0 0.0
        %749 = vmatpush1.msra.mxu0 0.0
        %750 = vmatprep.subr.mxu0 0.0
        %751 = vmatpush1.msra.mxu0 0.0
        %752 = vmatprep.subr.mxu0 0.0
        %753 = vmatpush1.msra.mxu0 0.0
        %754 = vmatprep.subr.mxu0 0.0
        %755 = vmatpush1.msra.mxu0 0.0
        %756 = vmatprep.subr.mxu0 0.0
        %757 = vmatpush1.msra.mxu0 0.0
        %758 = vmatprep.subr.mxu0 0.0
        %759 = vmatpush1.msra.mxu0 0.0
        %760 = vmatprep.subr.mxu0 0.0
        %761 = vmatpush1.msra.mxu0 0.0
        %762 = vmatprep.subr.mxu0 0.0
        %763 = vmatpush1.msra.mxu0 0.0
        %764 = vmatprep.subr.mxu0 0.0
        %765 = vmatpush1.msra.mxu0 0.0
        %766 = vmatprep.subr.mxu0 0.0
        %767 = vmatpush1.msra.mxu0 0.0
        %768 = vmatprep.subr.mxu0 0.0
        %769 = vmatpush1.msra.mxu0 0.0
        %770 = vmatprep.subr.mxu0 0.0
        %771 = vmatpush1.msra.mxu0 0.0
        %772 = vmatprep.subr.mxu0 0.0
        %773 = vmatpush1.msra.mxu0 0.0
        %774 = vmatprep.subr.mxu0 0.0
        %775 = vmatpush1.msra.mxu0 0.0
        %776 = vmatprep.subr.mxu0 0.0
        %777 = vmatpush1.msra.mxu0 0.0
        %778 = vmatprep.subr.mxu0 0.0
        %779 = vmatpush1.msra.mxu0 0.0
        %780 = vmatprep.subr.mxu0 0.0
        %781 = vmatpush1.msra.mxu0 0.0
        %782 = vmatprep.subr.mxu0 0.0
        %783 = vmatpush1.msra.mxu0 0.0
        %784 = vmatprep.mubr.f32.mxu0 0.0
        %785 = vmatmul.mubr.f32.gmra.mrb[0].mxu0 %v718
        %v786 = vpop.f32.mrb[0].mxu0
        %v787 = vadd.f32 0.0, %v786
        %v788 = vpop.f32.mrb[0].mxu0
        %v789 = vadd.f32 0.0, %v788
        %790 = vdwg.mxu0
        %v791 = vld [vmem:[%s373] sm:$0xff]
        %792 = vset.pattern.permute.xlu0 0
        %793 = vperm.xlu0 %792, %v791
        %v794 = vpop.permute.xlu0 %793
        %vm795 = vcmp.eq.s32.totalorder %v388, %v794
        %v796 = vsel %vm795, 1, 0
        %v797 = vcvt.s32.f32 %v796
        %v799 = vsel %vm716, %v797, 0
        %801 = vmatprep.subr.mxu0 %v385
        %802 = vmatpush1.msra.mxu0 %v384
        %803 = vmatprep.subr.mxu0 0.0
        %804 = vmatpush1.msra.mxu0 0.0
        %805 = vmatprep.subr.mxu0 0.0
        %806 = vmatpush1.msra.mxu0 0.0
        %807 = vmatprep.subr.mxu0 0.0
        %808 = vmatpush1.msra.mxu0 0.0
        %809 = vmatprep.subr.mxu0 0.0
        %810 = vmatpush1.msra.mxu0 0.0
        %811 = vmatprep.subr.mxu0 0.0
        %812 = vmatpush1.msra.mxu0 0.0
        %813 = vmatprep.subr.mxu0 0.0
        %814 = vmatpush1.msra.mxu0 0.0
        %815 = vmatprep.subr.mxu0 0.0
        %816 = vmatpush1.msra.mxu0 0.0
        %817 = vmatprep.subr.mxu0 0.0
        %818 = vmatpush1.msra.mxu0 0.0
        %819 = vmatprep.subr.mxu0 0.0
        %820 = vmatpush1.msra.mxu0 0.0
        %821 = vmatprep.subr.mxu0 0.0
        %822 = vmatpush1.msra.mxu0 0.0
        %823 = vmatprep.subr.mxu0 0.0
        %824 = vmatpush1.msra.mxu0 0.0
        %825 = vmatprep.subr.mxu0 0.0
        %826 = vmatpush1.msra.mxu0 0.0
        %827 = vmatprep.subr.mxu0 0.0
        %828 = vmatpush1.msra.mxu0 0.0
        %829 = vmatprep.subr.mxu0 0.0
        %830 = vmatpush1.msra.mxu0 0.0
        %831 = vmatprep.subr.mxu0 0.0
        %832 = vmatpush1.msra.mxu0 0.0
        %833 = vmatprep.subr.mxu0 0.0
        %834 = vmatpush1.msra.mxu0 0.0
        %835 = vmatprep.subr.mxu0 0.0
        %836 = vmatpush1.msra.mxu0 0.0
        %837 = vmatprep.subr.mxu0 0.0
        %838 = vmatpush1.msra.mxu0 0.0
        %839 = vmatprep.subr.mxu0 0.0
        %840 = vmatpush1.msra.mxu0 0.0
        %841 = vmatprep.subr.mxu0 0.0
        %842 = vmatpush1.msra.mxu0 0.0
        %843 = vmatprep.subr.mxu0 0.0
        %844 = vmatpush1.msra.mxu0 0.0
        %845 = vmatprep.subr.mxu0 0.0
        %846 = vmatpush1.msra.mxu0 0.0
        %847 = vmatprep.subr.mxu0 0.0
        %848 = vmatpush1.msra.mxu0 0.0
        %849 = vmatprep.subr.mxu0 0.0
        %850 = vmatpush1.msra.mxu0 0.0
        %851 = vmatprep.subr.mxu0 0.0
        %852 = vmatpush1.msra.mxu0 0.0
        %853 = vmatprep.subr.mxu0 0.0
        %854 = vmatpush1.msra.mxu0 0.0
        %855 = vmatprep.subr.mxu0 0.0
        %856 = vmatpush1.msra.mxu0 0.0
        %857 = vmatprep.subr.mxu0 0.0
        %858 = vmatpush1.msra.mxu0 0.0
        %859 = vmatprep.subr.mxu0 0.0
        %860 = vmatpush1.msra.mxu0 0.0
        %861 = vmatprep.subr.mxu0 0.0
        %862 = vmatpush1.msra.mxu0 0.0
        %863 = vmatprep.subr.mxu0 0.0
        %864 = vmatpush1.msra.mxu0 0.0
        %865 = vmatprep.mubr.f32.mxu0 0.0
        %866 = vmatmul.mubr.f32.gmra.mrb[0].mxu0 %v799
        %v867 = vpop.f32.mrb[0].mxu0
        %v868 = vadd.f32 0.0, %v867
        %v869 = vpop.f32.mrb[0].mxu0
        %v870 = vadd.f32 0.0, %v869
        %871 = vdwg.mxu0
        %s872 = smul.u32 %s20, 8
        %v873 = vlaneseq
        %v874 = vshrl.u32 %v873, 7
        %v875 = vstv %s872
        %v876 = vadd.s32 %v875, %v874
        %vm877 = vcmp.lt.s32.totalorder %v876, 20
        %v878 = vsel %vm877, 1, 0
        %v879 = vcvt.s32.f32 %v878
        %v880 = vmul.f32 %v466, %v789
        %881 = vadd.xlane.f32.xlu0 %v880
        %v882 = vpop.xlane.xlu0 %881
        %v883 = vmul.f32 %v546, %v789
        %884 = vadd.xlane.f32.xlu0 %v883
        %v885 = vpop.xlane.xlu0 %884
        %v886 = vadd.f32 %v466, %v787
        %v887 = vsub.f32 %v886, %v546
        %v888 = vsub.f32 %v882, %v885
        %v889 = vmul.f32 %v888, %v789
        %v890 = vsub.f32 %v887, %v889
        %v891 = vand.u32 2147483647, %v890
        %892 = vadd.xlane.f32.xlu0 %v891
        %v893 = vpop.xlane.xlu0 %892
        %v894 = vand.u32 2147483647, %v466
        %895 = vadd.xlane.f32.xlu0 %v894
        %v896 = vpop.xlane.xlu0 %895
        %v897 = vand.u32 2147483647, %v546
        %898 = vadd.xlane.f32.xlu0 %v897
        %v899 = vpop.xlane.xlu0 %898
        %v900 = vadd.f32 %v896, %v899
        %v901 = vmul.f32 %v787, %v787
        %902 = vadd.xlane.f32.xlu0 %v901
        %v903 = vpop.xlane.xlu0 %902
        %v904 = vmul.f32 %v626, %v870
        %905 = vadd.xlane.f32.xlu0 %v904
        %v906 = vpop.xlane.xlu0 %905
        %v907 = vmul.f32 %v706, %v870
        %908 = vadd.xlane.f32.xlu0 %v907
        %v909 = vpop.xlane.xlu0 %908
        %v910 = vadd.f32 %v626, %v868
        %v911 = vsub.f32 %v910, %v706
        %v912 = vsub.f32 %v906, %v909
        %v913 = vmul.f32 %v912, %v870
        %v914 = vsub.f32 %v911, %v913
        %v915 = vand.u32 2147483647, %v914
        %916 = vadd.xlane.f32.xlu0 %v915
        %v917 = vpop.xlane.xlu0 %916
        %v918 = vand.u32 2147483647, %v626
        %919 = vadd.xlane.f32.xlu0 %v918
        %v920 = vpop.xlane.xlu0 %919
        %v921 = vand.u32 2147483647, %v706
        %922 = vadd.xlane.f32.xlu0 %v921
        %v923 = vpop.xlane.xlu0 %922
        %v924 = vadd.f32 %v920, %v923
        %v925 = vmul.f32 %v868, %v868
        %926 = vadd.xlane.f32.xlu0 %v925
        %v927 = vpop.xlane.xlu0 %926
        %v928 = vsub.f32 %v893, %v917
        %v929 = vadd.f32 %v928, 4.0
        %v930 = vmax.f32 %v929, 0.0
        %v931 = vmul.f32 %v930, %v879
        %vm932 = vcmask 7168
        %v933 = vsel %vm932, %v931, 0.0
        %934 = vadd.xlane.f32.xlu0 %v933
        %v935 = vpop.xlane.xlu0 %934
        %v936 = vrot.slane %v935, 4
        %v937 = vadd.f32 %v935, %v936
        %v938 = vrot.slane %v937, 2
        %v939 = vadd.f32 %v937, %v938
        %v940 = vrot.slane %v939, 1
        %v941 = vadd.f32 %v939, %v940
        %s942 = vtos %v941
        %s943 = smul.f32 %s942, 0.05
        %v944 = vadd.f32 %v900, %v924
        %v945 = vmul.f32 %v944, %v879
        %v946 = vsel %vm932, %v945, 0.0
        %947 = vadd.xlane.f32.xlu0 %v946
        %v948 = vpop.xlane.xlu0 %947
        %v949 = vrot.slane %v948, 4
        %v950 = vadd.f32 %v948, %v949
        %v951 = vrot.slane %v950, 2
        %v952 = vadd.f32 %v950, %v951
        %v953 = vrot.slane %v952, 1
        %v954 = vadd.f32 %v952, %v953
        %s955 = vtos %v954
        %s956 = smul.f32 %s955, 0.05
        %v957 = vadd.f32 %v903, %v927
        %v958 = vmul.f32 %v957, %v879
        %v959 = vsel %vm932, %v958, 0.0
        %960 = vadd.xlane.f32.xlu0 %v959
        %v961 = vpop.xlane.xlu0 %960
        %v962 = vrot.slane %v961, 4
        %v963 = vadd.f32 %v961, %v962
        %v964 = vrot.slane %v963, 2
        %v965 = vadd.f32 %v963, %v964
        %v966 = vrot.slane %v965, 1
        %v967 = vadd.f32 %v965, %v966
        %s968 = vtos %v967
        %s969 = smul.f32 %s968, 0.000390625
        %s970 = sadd.f32 %s956, %s969
        %s971 = smul.f32 %s970, 0.0033333334
        %s972 = sadd.f32 %s943, %s971
        %v973 = vld [vmem:[#allocation2] sm:$0x1]
        %v974 = vstv %s972
        %v975 = vadd.f32 %v973, %v974
        %vm976 = vcmask 0
        %977 = vst.msk [vmem:[#allocation2] sm:$0x1] %vm976, %v975
        %p978 = scmp.eq.s32.totalorder %s20, 2
        // Predicated region
        $region57: #{tpu_custom_call.1} parent=51 // pred_check
          %p979 = pneg %p978
        $region58: #{tpu_custom_call.1} parent=51 // pred_check_branch
          %981 = sbr.rel (%p979) target = $region60
        $region59: #{tpu_custom_call.1} parent=51 // pred_region
          %v982 = vld [vmem:[#allocation2] sm:$0x1]
          %v983 = vsub.f32 %v982, 0.013333334
          %984 = vst.msk [vmem:[#allocation3] sm:$0x1] %vm976, %v983
        $region60: #{tpu_custom_call.1} parent=51 // pred_fallthru
          _
        // Predicated region
        $region61: #{tpu_custom_call.1} parent=51 // pred_check
          %p985 = pneg %p231
        $region62: #{tpu_custom_call.1} parent=51 // pred_check_branch
          %987 = sbr.rel (%p985) target = $region64
        $region63: #{tpu_custom_call.1} parent=51 // pred_region
          %s989 = ssub.s32 16, 16
          %990 = vsyncadd [#allocation4], %s989
          %s992 = sshll.u32 [#allocation3], 4
          %s993 = int_to_ptr.vmem [resolvable:$true] %s992
          %995 = dma.vmem_to_hbm [thread:$0]  %s993, 16, %s8, [#allocation4]
        $region64: #{tpu_custom_call.1} parent=51 // pred_fallthru
          _
        // Predicated region
        $region65: #{tpu_custom_call.1} parent=51 // pred_check
          %p996 = pneg %p231
        $region66: #{tpu_custom_call.1} parent=51 // pred_check_branch
          %998 = sbr.rel (%p996) target = $region68
        $region67: #{tpu_custom_call.1} parent=51 // pred_region
          %999 = dma.done [#allocation4], 16
        $region68: #{tpu_custom_call.1} parent=51 // pred_fallthru
          _
      $region52: #{tpu_custom_call.1} parent=5 // pred_fallthru
        _
      %p1000 = scmp.le.s32.totalorder 2, %s15
      // Predicated region
      $region69: #{tpu_custom_call.1} parent=5 // pred_check
        %p1001 = pneg %p1000
      $region70: #{tpu_custom_call.1} parent=5 // pred_check_branch
        %1003 = sbr.rel (%p1001) target = $region72
      $region71: #{tpu_custom_call.1} parent=5 // pred_region
        %s1004 = ssub.s32 %s15, 2
      $region72: #{tpu_custom_call.1} parent=5 // pred_fallthru
        _
    $region6: #{tpu_custom_call.1} parent=1 // loop_footer
      %s19 = sadd.s32 1, %s15
    $region7: #{tpu_custom_call.1} parent=1 // loop_footer_branch
      %14 = sbr.rel target = $region3
    $region8: #{tpu_custom_call.1} parent=1 // loop_exit
      _
    %1005 = vsyncpa [#allocation4], 1
    %s1006 = scalar_lea.sflag [#allocation4], 1
    %1007 = vsyncpa %s1006, 1

</llo_original>
